<compile_context>
chip_gen: v6e
topology: v6e:2x2x1
jax: 0.10.0
libtpu: 0.0.40
codegen_flags: <defaults>
</compile_context>

<pallas_src>
import jax
import jax.numpy as jnp
from jax.experimental import pallas as pl
from jax.experimental.pallas import tpu as pltpu


def _round_up(x, m):
    return ((x + m - 1) // m) * m


def make_rnn_kernel(num_layers, tile_t, num_blocks, matmul_dtype):
    def kernel(*refs):
        idx = 0
        x_ref = refs[idx]; idx += 1            # (TILE_T, Bp, Hp) precomputed x@W_ih0 + b0
        w_hh0_ref = refs[idx]; idx += 1        # (Hp, Hp)
        cat_refs, bias_refs = [], []
        for _ in range(num_layers - 1):
            cat_refs.append(refs[idx]); idx += 1    # (2Hp, Hp) fused [W_ih; W_hh]
            bias_refs.append(refs[idx]); idx += 1   # (1, Hp)  b_ih + b_hh
        fc_w_ref = refs[idx]; idx += 1         # (Hp, Cp)
        fc_b_ref = refs[idx]; idx += 1         # (1, Cp)
        out_ref = refs[idx]; idx += 1          # (Bp, Cp)
        h_ref = refs[idx]                      # VMEM scratch (L, Bp, Hp) f32

        tb = pl.program_id(0)

        @pl.when(tb == 0)
        def _init():
            h_ref[...] = jnp.zeros_like(h_ref)      # h0 = zeros

        # Hoist weight reads out of the timestep loop (loaded once per grid step).
        w_hh0 = w_hh0_ref[...]
        w_cats = [r[...] for r in cat_refs]
        biases = [r[...] for r in bias_refs]

        last = None
        for tt in range(tile_t):                    # static unrolled inner loop
            # layer 0: input projection already folded into x_ref
            pre0 = x_ref[tt] + jnp.dot(
                h_ref[0].astype(matmul_dtype), w_hh0,
                preferred_element_type=jnp.float32)
            h_new = jnp.tanh(pre0)                  # f32 tanh (EUP)
            h_ref[0] = h_new
            inp = h_new
            # layers >= 1: single fused matmul per layer
            for l in range(1, num_layers):
                cat = jnp.concatenate([inp, h_ref[l]], axis=-1)  # (Bp, 2Hp)
                pre = jnp.dot(cat.astype(matmul_dtype), w_cats[l - 1],
                              preferred_element_type=jnp.float32) + biases[l - 1]
                h_new = jnp.tanh(pre)
                h_ref[l] = h_new
                inp = h_new
            last = inp

        # fc head on the last timestep's top-layer hidden state
        @pl.when(tb == num_blocks - 1)
        def _head():
            out_ref[...] = (jnp.dot(last.astype(matmul_dtype), fc_w_ref[...],
                                    preferred_element_type=jnp.float32)
                            + fc_b_ref[...])

    return kernel


def rnn_forward(x, params, *, tile_t=None, matmul_dtype=jnp.float32):
    """x: (B, T, D) float32. Returns (B, num_classes) float32."""
    B, T, D = x.shape
    num_layers = len(params["w_ih_T"])
    H = params["w_hh_T"][0].shape[0]
    C = params["fc_w_T"].shape[1]
    f32 = jnp.float32

    # Pad to vreg/MXU-friendly sizes: sublanes -> 8, lanes -> 128.
    Hp = _round_up(H, 128)
    Bp = _round_up(B, 8)
    Cp = _round_up(C, 128)

    if tile_t is None:
        tile_t = 1
        for cand in range(1, min(T, 32) + 1):       # largest divisor of T <= 32
            if T % cand == 0:
                tile_t = cand
    num_blocks = T // tile_t

    def padw(w, rows, cols):
        return jnp.pad(w.astype(f32), ((0, rows - w.shape[0]), (0, cols - w.shape[1])))

    # --- Hoist layer-0 input projection: one big time-parallel matmul in XLA ---
    w_ih0 = padw(params["w_ih_T"][0], D, Hp)                              # (D, Hp)
    b0 = padw(params["b_ih"][0] + params["b_hh"][0], 1, Hp)               # (1, Hp)
    x_tm = jnp.transpose(x.astype(f32), (1, 0, 2))                        # (T, B, D)
    x_proj = (x_tm.reshape(T * B, D) @ w_ih0 + b0).reshape(T, B, Hp)
    x_proj = jnp.pad(x_proj, ((0, 0), (0, Bp - B), (0, 0)))               # (T, Bp, Hp)

    # Layer-0 recurrent weight; layers >= 1 get fused [W_ih; W_hh] + summed bias.
    w_hh0 = padw(params["w_hh_T"][0], Hp, Hp).astype(matmul_dtype)

    flat_args = [x_proj, w_hh0]
    in_specs = [
        pl.BlockSpec((tile_t, Bp, Hp), lambda tb: (tb, 0, 0)),
        pl.BlockSpec((Hp, Hp), lambda tb: (0, 0)),
    ]
    for l in range(1, num_layers):
        w_cat = jnp.concatenate(
            [padw(params["w_ih_T"][l], Hp, Hp),
             padw(params["w_hh_T"][l], Hp, Hp)], axis=0).astype(matmul_dtype)  # (2Hp, Hp)
        b = padw(params["b_ih"][l] + params["b_hh"][l], 1, Hp)                 # (1, Hp)
        flat_args += [w_cat, b]
        in_specs += [pl.BlockSpec((2 * Hp, Hp), lambda tb: (0, 0)),
                     pl.BlockSpec((1, Hp), lambda tb: (0, 0))]

    fc_w = padw(params["fc_w_T"], Hp, Cp).astype(matmul_dtype)                 # (Hp, Cp)
    fc_b = padw(params["fc_b"], 1, Cp)                                         # (1, Cp)
    flat_args += [fc_w, fc_b]
    in_specs += [pl.BlockSpec((Hp, Cp), lambda tb: (0, 0)),
                 pl.BlockSpec((1, Cp), lambda tb: (0, 0))]

    kernel = make_rnn_kernel(num_layers, tile_t, num_blocks, matmul_dtype)

    out = pl.pallas_call(
        kernel,
        out_shape=jax.ShapeDtypeStruct((Bp, Cp), jnp.float32),
        grid_spec=pltpu.PrefetchScalarGridSpec(
            num_scalar_prefetch=0,
            grid=(num_blocks,),
            in_specs=in_specs,
            out_specs=pl.BlockSpec((Bp, Cp), lambda tb: (0, 0)),
            scratch_shapes=[pltpu.VMEM((num_layers, Bp, Hp), jnp.float32)],
        ),
        compiler_params=pltpu.CompilerParams(
            dimension_semantics=("arbitrary",)),   # time axis is inherently serial
    )(*flat_args)

    return out[:B, :C]


def init_params(key, input_size, hidden_size, num_layers, num_classes):
    params = {"w_ih_T": [], "w_hh_T": [], "b_ih": [], "b_hh": []}
    bound = 1.0 / jnp.sqrt(hidden_size)
    for l in range(num_layers):
        d_in = input_size if l == 0 else hidden_size
        key, k1, k2, k3, k4 = jax.random.split(key, 5)
        # PyTorch stores weight_ih_l{l} as (H, d_in); we keep the transpose (d_in, H).
        params["w_ih_T"].append(
            jax.random.uniform(k1, (d_in, hidden_size), jnp.float32, -bound, bound))
        params["w_hh_T"].append(
            jax.random.uniform(k2, (hidden_size, hidden_size), jnp.float32, -bound, bound))
        params["b_ih"].append(
            jax.random.uniform(k3, (1, hidden_size), jnp.float32, -bound, bound))
        params["b_hh"].append(
            jax.random.uniform(k4, (1, hidden_size), jnp.float32, -bound, bound))
    key, k5, k6 = jax.random.split(key, 3)
    fc_bound = 1.0 / jnp.sqrt(hidden_size)
    params["fc_w_T"] = jax.random.uniform(
        k5, (hidden_size, num_classes), jnp.float32, -fc_bound, fc_bound)
    params["fc_b"] = jax.random.uniform(
        k6, (1, num_classes), jnp.float32, -fc_bound, fc_bound)
    return params


def rnn_forward_ref(x, params):
    """Pure-JAX reference of the PyTorch forward (eval mode, noise is identity)."""
    B, T, D = x.shape
    num_layers = len(params["w_ih_T"])
    H = params["w_hh_T"][0].shape[0]
    h = [jnp.zeros((B, H), jnp.float32) for _ in range(num_layers)]
    last = None
    for t in range(T):
        inp = x[:, t, :]
        for l in range(num_layers):
            pre = (inp @ params["w_ih_T"][l] + params["b_ih"][l]
                   + h[l] @ params["w_hh_T"][l] + params["b_hh"][l])
            h[l] = jnp.tanh(pre)
            inp = h[l]
        last = inp
    return last @ params["fc_w_T"] + params["fc_b"]


if __name__ == "__main__":
    B, T, D = 2, 8, 16          # batch, seq len, input_size
    H, L, C = 32, 2, 4          # hidden_size, num_layers, num_classes
    # gaussian_noise stddev is irrelevant in eval mode (identity).

    key = jax.random.PRNGKey(0)
    key, kx, kp = jax.random.split(key, 3)
    x = jax.random.normal(kx, (B, T, D), jnp.float32)
    params = init_params(kp, D, H, L, C)

    out = rnn_forward(x, params)            # default matmul_dtype=f32 (exact vs ref)
    out = jax.block_until_ready(out)

    ref = rnn_forward_ref(x, params)
    assert out.shape == (B, C)
    assert jnp.allclose(out, ref, atol=1e-5, rtol=1e-5), "mismatch vs reference"
    print("KERNEL_OK")
</pallas_src>

<mosaic_0001>
module attributes {stable_mosaic.version = 11 : i64} {
  func.func @kernel(%arg0: i32, %arg1: memref<8x8x128xf32, #tpu.memory_space<vmem>>, %arg2: memref<128x128xf32, #tpu.memory_space<vmem>>, %arg3: memref<256x128xf32, #tpu.memory_space<vmem>>, %arg4: memref<1x128xf32, #tpu.memory_space<vmem>>, %arg5: memref<128x128xf32, #tpu.memory_space<vmem>>, %arg6: memref<1x128xf32, #tpu.memory_space<vmem>>, %arg7: memref<8x128xf32, #tpu.memory_space<vmem>>, %arg8: memref<2x8x128xf32, #tpu.memory_space<vmem>>) attributes {dimension_semantics = [#tpu.dimension_semantics<arbitrary>], iteration_bounds = array<i64: 1>, scalar_prefetch = 0 : i64, scratch_operands = 1 : i64, tpu.core_type = #tpu.core_type<tc>, window_params = [{transform_indices = @transform_0, window_bounds = array<i64: 8, 8, 128>}, {pipeline_mode = #tpu.pipeline_mode<synchronous>, transform_indices = @transform_1, window_bounds = array<i64: 128, 128>}, {pipeline_mode = #tpu.pipeline_mode<synchronous>, transform_indices = @transform_2, window_bounds = array<i64: 256, 128>}, {pipeline_mode = #tpu.pipeline_mode<synchronous>, transform_indices = @transform_3, window_bounds = array<i64: 1, 128>}, {pipeline_mode = #tpu.pipeline_mode<synchronous>, transform_indices = @transform_4, window_bounds = array<i64: 128, 128>}, {pipeline_mode = #tpu.pipeline_mode<synchronous>, transform_indices = @transform_5, window_bounds = array<i64: 1, 128>}, {pipeline_mode = #tpu.pipeline_mode<synchronous>, transform_indices = @transform_6, window_bounds = array<i64: 8, 128>}]} {
    %c0_i32 = arith.constant 0 : i32
    %0 = arith.cmpi eq, %arg0, %c0_i32 : i32
    %1 = arith.extui %0 : i1 to i32
    %c0_i32_0 = arith.constant 0 : i32
    %2 = arith.cmpi ne, %1, %c0_i32_0 : i32
    scf.if %2 {
      %cst_136 = arith.constant 0.000000e+00 : f32
      %169 = vector.broadcast %cst_136 : f32 to vector<2x8x128xf32>
      %c0_137 = arith.constant 0 : index
      %c0_138 = arith.constant 0 : index
      %c0_139 = arith.constant 0 : index
      %170 = vector.load %arg8[%c0_137, %c0_138, %c0_139] : memref<2x8x128xf32, #tpu.memory_space<vmem>>, vector<2x8x128xf32>
      tpu.vector_store %arg8[%c0_137, %c0_138, %c0_139], %169 {strides = array<i32>} : memref<2x8x128xf32, #tpu.memory_space<vmem>>, vector<2x8x128xf32>,
    } else {
    }
    %c0 = arith.constant 0 : index
    %c0_1 = arith.constant 0 : index
    %3 = vector.load %arg2[%c0, %c0_1] : memref<128x128xf32, #tpu.memory_space<vmem>>, vector<128x128xf32>
    %c0_2 = arith.constant 0 : index
    %c0_3 = arith.constant 0 : index
    %4 = vector.load %arg3[%c0_2, %c0_3] : memref<256x128xf32, #tpu.memory_space<vmem>>, vector<256x128xf32>
    %c0_4 = arith.constant 0 : index
    %c0_5 = arith.constant 0 : index
    %5 = vector.load %arg4[%c0_4, %c0_5] : memref<1x128xf32, #tpu.memory_space<vmem>>, vector<1x128xf32>
    %c0_6 = arith.constant 0 : index
    %c0_7 = arith.constant 0 : index
    %c0_8 = arith.constant 0 : index
    %6 = vector.load %arg1[%c0_6, %c0_7, %c0_8] : memref<8x8x128xf32, #tpu.memory_space<vmem>>, vector<1x8x128xf32>
    %7 = vector.shape_cast %6 : vector<1x8x128xf32> to vector<8x128xf32>
    %c0_9 = arith.constant 0 : index
    %c0_10 = arith.constant 0 : index
    %c0_11 = arith.constant 0 : index
    %8 = vector.load %arg8[%c0_9, %c0_10, %c0_11] : memref<2x8x128xf32, #tpu.memory_space<vmem>>, vector<1x8x128xf32>
    %9 = vector.shape_cast %8 : vector<1x8x128xf32> to vector<8x128xf32>
    %cst = arith.constant dense<0.000000e+00> : vector<8x128xf32>
    %10 = tpu.matmul %9, %3, %cst {dimension_numbers = #tpu.dot_dimension_numbers<[1], [0], [0], [1], [0, 0, 1, 1], [], []>} : vector<8x128xf32>, vector<128x128xf32>, vector<8x128xf32> -> vector<8x128xf32>
    %11 = arith.addf %7, %10 : vector<8x128xf32>
    %12 = math.tanh %11 : vector<8x128xf32>
    %c0_12 = arith.constant 0 : index
    %c0_13 = arith.constant 0 : index
    %c0_14 = arith.constant 0 : index
    %13 = vector.load %arg8[%c0_12, %c0_13, %c0_14] : memref<2x8x128xf32, #tpu.memory_space<vmem>>, vector<1x8x128xf32>
    %14 = vector.shape_cast %13 : vector<1x8x128xf32> to vector<8x128xf32>
    %15 = vector.shape_cast %12 : vector<8x128xf32> to vector<1x8x128xf32>
    tpu.vector_store %arg8[%c0_12, %c0_13, %c0_14], %15 {strides = array<i32>} : memref<2x8x128xf32, #tpu.memory_space<vmem>>, vector<1x8x128xf32>,
    %c1 = arith.constant 1 : index
    %c0_15 = arith.constant 0 : index
    %c0_16 = arith.constant 0 : index
    %16 = vector.load %arg8[%c1, %c0_15, %c0_16] : memref<2x8x128xf32, #tpu.memory_space<vmem>>, vector<1x8x128xf32>
    %17 = vector.shape_cast %16 : vector<1x8x128xf32> to vector<8x128xf32>
    %18 = tpu.concatenate %12, %17 in 1 : vector<8x128xf32>, vector<8x128xf32> -> vector<8x256xf32>
    %cst_17 = arith.constant dense<0.000000e+00> : vector<8x128xf32>
    %19 = tpu.matmul %18, %4, %cst_17 {dimension_numbers = #tpu.dot_dimension_numbers<[1], [0], [0], [1], [0, 0, 1, 1], [], []>} : vector<8x256xf32>, vector<256x128xf32>, vector<8x128xf32> -> vector<8x128xf32>
    %20 = vector.broadcast %5 : vector<1x128xf32> to vector<8x128xf32>
    %21 = arith.addf %19, %20 : vector<8x128xf32>
    %22 = math.tanh %21 : vector<8x128xf32>
    %c1_18 = arith.constant 1 : index
    %c0_19 = arith.constant 0 : index
    %c0_20 = arith.constant 0 : index
    %23 = vector.load %arg8[%c1_18, %c0_19, %c0_20] : memref<2x8x128xf32, #tpu.memory_space<vmem>>, vector<1x8x128xf32>
    %24 = vector.shape_cast %23 : vector<1x8x128xf32> to vector<8x128xf32>
    %25 = vector.shape_cast %22 : vector<8x128xf32> to vector<1x8x128xf32>
    tpu.vector_store %arg8[%c1_18, %c0_19, %c0_20], %25 {strides = array<i32>} : memref<2x8x128xf32, #tpu.memory_space<vmem>>, vector<1x8x128xf32>,
    %c1_21 = arith.constant 1 : index
    %c0_22 = arith.constant 0 : index
    %c0_23 = arith.constant 0 : index
    %26 = vector.load %arg1[%c1_21, %c0_22, %c0_23] : memref<8x8x128xf32, #tpu.memory_space<vmem>>, vector<1x8x128xf32>
    %27 = vector.shape_cast %26 : vector<1x8x128xf32> to vector<8x128xf32>
    %c0_24 = arith.constant 0 : index
    %c0_25 = arith.constant 0 : index
    %c0_26 = arith.constant 0 : index
    %28 = vector.load %arg8[%c0_24, %c0_25, %c0_26] : memref<2x8x128xf32, #tpu.memory_space<vmem>>, vector<1x8x128xf32>
    %29 = vector.shape_cast %28 : vector<1x8x128xf32> to vector<8x128xf32>
    %cst_27 = arith.constant dense<0.000000e+00> : vector<8x128xf32>
    %30 = tpu.matmul %29, %3, %cst_27 {dimension_numbers = #tpu.dot_dimension_numbers<[1], [0], [0], [1], [0, 0, 1, 1], [], []>} : vector<8x128xf32>, vector<128x128xf32>, vector<8x128xf32> -> vector<8x128xf32>
    %31 = arith.addf %27, %30 : vector<8x128xf32>
    %32 = math.tanh %31 : vector<8x128xf32>
    %c0_28 = arith.constant 0 : index
    %c0_29 = arith.constant 0 : index
    %c0_30 = arith.constant 0 : index
    %33 = vector.load %arg8[%c0_28, %c0_29, %c0_30] : memref<2x8x128xf32, #tpu.memory_space<vmem>>, vector<1x8x128xf32>
    %34 = vector.shape_cast %33 : vector<1x8x128xf32> to vector<8x128xf32>
    %35 = vector.shape_cast %32 : vector<8x128xf32> to vector<1x8x128xf32>
    tpu.vector_store %arg8[%c0_28, %c0_29, %c0_30], %35 {strides = array<i32>} : memref<2x8x128xf32, #tpu.memory_space<vmem>>, vector<1x8x128xf32>,
    %c1_31 = arith.constant 1 : index
    %c0_32 = arith.constant 0 : index
    %c0_33 = arith.constant 0 : index
    %36 = vector.load %arg8[%c1_31, %c0_32, %c0_33] : memref<2x8x128xf32, #tpu.memory_space<vmem>>, vector<1x8x128xf32>
    %37 = vector.shape_cast %36 : vector<1x8x128xf32> to vector<8x128xf32>
    %38 = tpu.concatenate %32, %37 in 1 : vector<8x128xf32>, vector<8x128xf32> -> vector<8x256xf32>
    %cst_34 = arith.constant dense<0.000000e+00> : vector<8x128xf32>
    %39 = tpu.matmul %38, %4, %cst_34 {dimension_numbers = #tpu.dot_dimension_numbers<[1], [0], [0], [1], [0, 0, 1, 1], [], []>} : vector<8x256xf32>, vector<256x128xf32>, vector<8x128xf32> -> vector<8x128xf32>
    %40 = vector.broadcast %5 : vector<1x128xf32> to vector<8x128xf32>
    %41 = arith.addf %39, %40 : vector<8x128xf32>
    %42 = math.tanh %41 : vector<8x128xf32>
    %c1_35 = arith.constant 1 : index
    %c0_36 = arith.constant 0 : index
    %c0_37 = arith.constant 0 : index
    %43 = vector.load %arg8[%c1_35, %c0_36, %c0_37] : memref<2x8x128xf32, #tpu.memory_space<vmem>>, vector<1x8x128xf32>
    %44 = vector.shape_cast %43 : vector<1x8x128xf32> to vector<8x128xf32>
    %45 = vector.shape_cast %42 : vector<8x128xf32> to vector<1x8x128xf32>
    tpu.vector_store %arg8[%c1_35, %c0_36, %c0_37], %45 {strides = array<i32>} : memref<2x8x128xf32, #tpu.memory_space<vmem>>, vector<1x8x128xf32>,
    %c2 = arith.constant 2 : index
    %c0_38 = arith.constant 0 : index
    %c0_39 = arith.constant 0 : index
    %46 = vector.load %arg1[%c2, %c0_38, %c0_39] : memref<8x8x128xf32, #tpu.memory_space<vmem>>, vector<1x8x128xf32>
    %47 = vector.shape_cast %46 : vector<1x8x128xf32> to vector<8x128xf32>
    %c0_40 = arith.constant 0 : index
    %c0_41 = arith.constant 0 : index
    %c0_42 = arith.constant 0 : index
    %48 = vector.load %arg8[%c0_40, %c0_41, %c0_42] : memref<2x8x128xf32, #tpu.memory_space<vmem>>, vector<1x8x128xf32>
    %49 = vector.shape_cast %48 : vector<1x8x128xf32> to vector<8x128xf32>
    %cst_43 = arith.constant dense<0.000000e+00> : vector<8x128xf32>
    %50 = tpu.matmul %49, %3, %cst_43 {dimension_numbers = #tpu.dot_dimension_numbers<[1], [0], [0], [1], [0, 0, 1, 1], [], []>} : vector<8x128xf32>, vector<128x128xf32>, vector<8x128xf32> -> vector<8x128xf32>
    %51 = arith.addf %47, %50 : vector<8x128xf32>
    %52 = math.tanh %51 : vector<8x128xf32>
    %c0_44 = arith.constant 0 : index
    %c0_45 = arith.constant 0 : index
    %c0_46 = arith.constant 0 : index
    %53 = vector.load %arg8[%c0_44, %c0_45, %c0_46] : memref<2x8x128xf32, #tpu.memory_space<vmem>>, vector<1x8x128xf32>
    %54 = vector.shape_cast %53 : vector<1x8x128xf32> to vector<8x128xf32>
    %55 = vector.shape_cast %52 : vector<8x128xf32> to vector<1x8x128xf32>
    tpu.vector_store %arg8[%c0_44, %c0_45, %c0_46], %55 {strides = array<i32>} : memref<2x8x128xf32, #tpu.memory_space<vmem>>, vector<1x8x128xf32>,
    %c1_47 = arith.constant 1 : index
    %c0_48 = arith.constant 0 : index
    %c0_49 = arith.constant 0 : index
    %56 = vector.load %arg8[%c1_47, %c0_48, %c0_49] : memref<2x8x128xf32, #tpu.memory_space<vmem>>, vector<1x8x128xf32>
    %57 = vector.shape_cast %56 : vector<1x8x128xf32> to vector<8x128xf32>
    %58 = tpu.concatenate %52, %57 in 1 : vector<8x128xf32>, vector<8x128xf32> -> vector<8x256xf32>
    %cst_50 = arith.constant dense<0.000000e+00> : vector<8x128xf32>
    %59 = tpu.matmul %58, %4, %cst_50 {dimension_numbers = #tpu.dot_dimension_numbers<[1], [0], [0], [1], [0, 0, 1, 1], [], []>} : vector<8x256xf32>, vector<256x128xf32>, vector<8x128xf32> -> vector<8x128xf32>
    %60 = vector.broadcast %5 : vector<1x128xf32> to vector<8x128xf32>
    %61 = arith.addf %59, %60 : vector<8x128xf32>
    %62 = math.tanh %61 : vector<8x128xf32>
    %c1_51 = arith.constant 1 : index
    %c0_52 = arith.constant 0 : index
    %c0_53 = arith.constant 0 : index
    %63 = vector.load %arg8[%c1_51, %c0_52, %c0_53] : memref<2x8x128xf32, #tpu.memory_space<vmem>>, vector<1x8x128xf32>
    %64 = vector.shape_cast %63 : vector<1x8x128xf32> to vector<8x128xf32>
    %65 = vector.shape_cast %62 : vector<8x128xf32> to vector<1x8x128xf32>
    tpu.vector_store %arg8[%c1_51, %c0_52, %c0_53], %65 {strides = array<i32>} : memref<2x8x128xf32, #tpu.memory_space<vmem>>, vector<1x8x128xf32>,
    %c3 = arith.constant 3 : index
    %c0_54 = arith.constant 0 : index
    %c0_55 = arith.constant 0 : index
    %66 = vector.load %arg1[%c3, %c0_54, %c0_55] : memref<8x8x128xf32, #tpu.memory_space<vmem>>, vector<1x8x128xf32>
    %67 = vector.shape_cast %66 : vector<1x8x128xf32> to vector<8x128xf32>
    %c0_56 = arith.constant 0 : index
    %c0_57 = arith.constant 0 : index
    %c0_58 = arith.constant 0 : index
    %68 = vector.load %arg8[%c0_56, %c0_57, %c0_58] : memref<2x8x128xf32, #tpu.memory_space<vmem>>, vector<1x8x128xf32>
    %69 = vector.shape_cast %68 : vector<1x8x128xf32> to vector<8x128xf32>
    %cst_59 = arith.constant dense<0.000000e+00> : vector<8x128xf32>
    %70 = tpu.matmul %69, %3, %cst_59 {dimension_numbers = #tpu.dot_dimension_numbers<[1], [0], [0], [1], [0, 0, 1, 1], [], []>} : vector<8x128xf32>, vector<128x128xf32>, vector<8x128xf32> -> vector<8x128xf32>
    %71 = arith.addf %67, %70 : vector<8x128xf32>
    %72 = math.tanh %71 : vector<8x128xf32>
    %c0_60 = arith.constant 0 : index
    %c0_61 = arith.constant 0 : index
    %c0_62 = arith.constant 0 : index
    %73 = vector.load %arg8[%c0_60, %c0_61, %c0_62] : memref<2x8x128xf32, #tpu.memory_space<vmem>>, vector<1x8x128xf32>
    %74 = vector.shape_cast %73 : vector<1x8x128xf32> to vector<8x128xf32>
    %75 = vector.shape_cast %72 : vector<8x128xf32> to vector<1x8x128xf32>
    tpu.vector_store %arg8[%c0_60, %c0_61, %c0_62], %75 {strides = array<i32>} : memref<2x8x128xf32, #tpu.memory_space<vmem>>, vector<1x8x128xf32>,
    %c1_63 = arith.constant 1 : index
    %c0_64 = arith.constant 0 : index
    %c0_65 = arith.constant 0 : index
    %76 = vector.load %arg8[%c1_63, %c0_64, %c0_65] : memref<2x8x128xf32, #tpu.memory_space<vmem>>, vector<1x8x128xf32>
    %77 = vector.shape_cast %76 : vector<1x8x128xf32> to vector<8x128xf32>
    %78 = tpu.concatenate %72, %77 in 1 : vector<8x128xf32>, vector<8x128xf32> -> vector<8x256xf32>
    %cst_66 = arith.constant dense<0.000000e+00> : vector<8x128xf32>
    %79 = tpu.matmul %78, %4, %cst_66 {dimension_numbers = #tpu.dot_dimension_numbers<[1], [0], [0], [1], [0, 0, 1, 1], [], []>} : vector<8x256xf32>, vector<256x128xf32>, vector<8x128xf32> -> vector<8x128xf32>
    %80 = vector.broadcast %5 : vector<1x128xf32> to vector<8x128xf32>
    %81 = arith.addf %79, %80 : vector<8x128xf32>
    %82 = math.tanh %81 : vector<8x128xf32>
    %c1_67 = arith.constant 1 : index
    %c0_68 = arith.constant 0 : index
    %c0_69 = arith.constant 0 : index
    %83 = vector.load %arg8[%c1_67, %c0_68, %c0_69] : memref<2x8x128xf32, #tpu.memory_space<vmem>>, vector<1x8x128xf32>
    %84 = vector.shape_cast %83 : vector<1x8x128xf32> to vector<8x128xf32>
    %85 = vector.shape_cast %82 : vector<8x128xf32> to vector<1x8x128xf32>
    tpu.vector_store %arg8[%c1_67, %c0_68, %c0_69], %85 {strides = array<i32>} : memref<2x8x128xf32, #tpu.memory_space<vmem>>, vector<1x8x128xf32>,
    %c4 = arith.constant 4 : index
    %c0_70 = arith.constant 0 : index
    %c0_71 = arith.constant 0 : index
    %86 = vector.load %arg1[%c4, %c0_70, %c0_71] : memref<8x8x128xf32, #tpu.memory_space<vmem>>, vector<1x8x128xf32>
    %87 = vector.shape_cast %86 : vector<1x8x128xf32> to vector<8x128xf32>
    %c0_72 = arith.constant 0 : index
    %c0_73 = arith.constant 0 : index
    %c0_74 = arith.constant 0 : index
    %88 = vector.load %arg8[%c0_72, %c0_73, %c0_74] : memref<2x8x128xf32, #tpu.memory_space<vmem>>, vector<1x8x128xf32>
    %89 = vector.shape_cast %88 : vector<1x8x128xf32> to vector<8x128xf32>
    %cst_75 = arith.constant dense<0.000000e+00> : vector<8x128xf32>
    %90 = tpu.matmul %89, %3, %cst_75 {dimension_numbers = #tpu.dot_dimension_numbers<[1], [0], [0], [1], [0, 0, 1, 1], [], []>} : vector<8x128xf32>, vector<128x128xf32>, vector<8x128xf32> -> vector<8x128xf32>
    %91 = arith.addf %87, %90 : vector<8x128xf32>
    %92 = math.tanh %91 : vector<8x128xf32>
    %c0_76 = arith.constant 0 : index
    %c0_77 = arith.constant 0 : index
    %c0_78 = arith.constant 0 : index
    %93 = vector.load %arg8[%c0_76, %c0_77, %c0_78] : memref<2x8x128xf32, #tpu.memory_space<vmem>>, vector<1x8x128xf32>
    %94 = vector.shape_cast %93 : vector<1x8x128xf32> to vector<8x128xf32>
    %95 = vector.shape_cast %92 : vector<8x128xf32> to vector<1x8x128xf32>
    tpu.vector_store %arg8[%c0_76, %c0_77, %c0_78], %95 {strides = array<i32>} : memref<2x8x128xf32, #tpu.memory_space<vmem>>, vector<1x8x128xf32>,
    %c1_79 = arith.constant 1 : index
    %c0_80 = arith.constant 0 : index
    %c0_81 = arith.constant 0 : index
    %96 = vector.load %arg8[%c1_79, %c0_80, %c0_81] : memref<2x8x128xf32, #tpu.memory_space<vmem>>, vector<1x8x128xf32>
    %97 = vector.shape_cast %96 : vector<1x8x128xf32> to vector<8x128xf32>
    %98 = tpu.concatenate %92, %97 in 1 : vector<8x128xf32>, vector<8x128xf32> -> vector<8x256xf32>
    %cst_82 = arith.constant dense<0.000000e+00> : vector<8x128xf32>
    %99 = tpu.matmul %98, %4, %cst_82 {dimension_numbers = #tpu.dot_dimension_numbers<[1], [0], [0], [1], [0, 0, 1, 1], [], []>} : vector<8x256xf32>, vector<256x128xf32>, vector<8x128xf32> -> vector<8x128xf32>
    %100 = vector.broadcast %5 : vector<1x128xf32> to vector<8x128xf32>
    %101 = arith.addf %99, %100 : vector<8x128xf32>
    %102 = math.tanh %101 : vector<8x128xf32>
    %c1_83 = arith.constant 1 : index
    %c0_84 = arith.constant 0 : index
    %c0_85 = arith.constant 0 : index
    %103 = vector.load %arg8[%c1_83, %c0_84, %c0_85] : memref<2x8x128xf32, #tpu.memory_space<vmem>>, vector<1x8x128xf32>
    %104 = vector.shape_cast %103 : vector<1x8x128xf32> to vector<8x128xf32>
    %105 = vector.shape_cast %102 : vector<8x128xf32> to vector<1x8x128xf32>
    tpu.vector_store %arg8[%c1_83, %c0_84, %c0_85], %105 {strides = array<i32>} : memref<2x8x128xf32, #tpu.memory_space<vmem>>, vector<1x8x128xf32>,
    %c5 = arith.constant 5 : index
    %c0_86 = arith.constant 0 : index
    %c0_87 = arith.constant 0 : index
    %106 = vector.load %arg1[%c5, %c0_86, %c0_87] : memref<8x8x128xf32, #tpu.memory_space<vmem>>, vector<1x8x128xf32>
    %107 = vector.shape_cast %106 : vector<1x8x128xf32> to vector<8x128xf32>
    %c0_88 = arith.constant 0 : index
    %c0_89 = arith.constant 0 : index
    %c0_90 = arith.constant 0 : index
    %108 = vector.load %arg8[%c0_88, %c0_89, %c0_90] : memref<2x8x128xf32, #tpu.memory_space<vmem>>, vector<1x8x128xf32>
    %109 = vector.shape_cast %108 : vector<1x8x128xf32> to vector<8x128xf32>
    %cst_91 = arith.constant dense<0.000000e+00> : vector<8x128xf32>
    %110 = tpu.matmul %109, %3, %cst_91 {dimension_numbers = #tpu.dot_dimension_numbers<[1], [0], [0], [1], [0, 0, 1, 1], [], []>} : vector<8x128xf32>, vector<128x128xf32>, vector<8x128xf32> -> vector<8x128xf32>
    %111 = arith.addf %107, %110 : vector<8x128xf32>
    %112 = math.tanh %111 : vector<8x128xf32>
    %c0_92 = arith.constant 0 : index
    %c0_93 = arith.constant 0 : index
    %c0_94 = arith.constant 0 : index
    %113 = vector.load %arg8[%c0_92, %c0_93, %c0_94] : memref<2x8x128xf32, #tpu.memory_space<vmem>>, vector<1x8x128xf32>
    %114 = vector.shape_cast %113 : vector<1x8x128xf32> to vector<8x128xf32>
    %115 = vector.shape_cast %112 : vector<8x128xf32> to vector<1x8x128xf32>
    tpu.vector_store %arg8[%c0_92, %c0_93, %c0_94], %115 {strides = array<i32>} : memref<2x8x128xf32, #tpu.memory_space<vmem>>, vector<1x8x128xf32>,
    %c1_95 = arith.constant 1 : index
    %c0_96 = arith.constant 0 : index
    %c0_97 = arith.constant 0 : index
    %116 = vector.load %arg8[%c1_95, %c0_96, %c0_97] : memref<2x8x128xf32, #tpu.memory_space<vmem>>, vector<1x8x128xf32>
    %117 = vector.shape_cast %116 : vector<1x8x128xf32> to vector<8x128xf32>
    %118 = tpu.concatenate %112, %117 in 1 : vector<8x128xf32>, vector<8x128xf32> -> vector<8x256xf32>
    %cst_98 = arith.constant dense<0.000000e+00> : vector<8x128xf32>
    %119 = tpu.matmul %118, %4, %cst_98 {dimension_numbers = #tpu.dot_dimension_numbers<[1], [0], [0], [1], [0, 0, 1, 1], [], []>} : vector<8x256xf32>, vector<256x128xf32>, vector<8x128xf32> -> vector<8x128xf32>
    %120 = vector.broadcast %5 : vector<1x128xf32> to vector<8x128xf32>
    %121 = arith.addf %119, %120 : vector<8x128xf32>
    %122 = math.tanh %121 : vector<8x128xf32>
    %c1_99 = arith.constant 1 : index
    %c0_100 = arith.constant 0 : index
    %c0_101 = arith.constant 0 : index
    %123 = vector.load %arg8[%c1_99, %c0_100, %c0_101] : memref<2x8x128xf32, #tpu.memory_space<vmem>>, vector<1x8x128xf32>
    %124 = vector.shape_cast %123 : vector<1x8x128xf32> to vector<8x128xf32>
    %125 = vector.shape_cast %122 : vector<8x128xf32> to vector<1x8x128xf32>
    tpu.vector_store %arg8[%c1_99, %c0_100, %c0_101], %125 {strides = array<i32>} : memref<2x8x128xf32, #tpu.memory_space<vmem>>, vector<1x8x128xf32>,
    %c6 = arith.constant 6 : index
    %c0_102 = arith.constant 0 : index
    %c0_103 = arith.constant 0 : index
    %126 = vector.load %arg1[%c6, %c0_102, %c0_103] : memref<8x8x128xf32, #tpu.memory_space<vmem>>, vector<1x8x128xf32>
    %127 = vector.shape_cast %126 : vector<1x8x128xf32> to vector<8x128xf32>
    %c0_104 = arith.constant 0 : index
    %c0_105 = arith.constant 0 : index
    %c0_106 = arith.constant 0 : index
    %128 = vector.load %arg8[%c0_104, %c0_105, %c0_106] : memref<2x8x128xf32, #tpu.memory_space<vmem>>, vector<1x8x128xf32>
    %129 = vector.shape_cast %128 : vector<1x8x128xf32> to vector<8x128xf32>
    %cst_107 = arith.constant dense<0.000000e+00> : vector<8x128xf32>
    %130 = tpu.matmul %129, %3, %cst_107 {dimension_numbers = #tpu.dot_dimension_numbers<[1], [0], [0], [1], [0, 0, 1, 1], [], []>} : vector<8x128xf32>, vector<128x128xf32>, vector<8x128xf32> -> vector<8x128xf32>
    %131 = arith.addf %127, %130 : vector<8x128xf32>
    %132 = math.tanh %131 : vector<8x128xf32>
    %c0_108 = arith.constant 0 : index
    %c0_109 = arith.constant 0 : index
    %c0_110 = arith.constant 0 : index
    %133 = vector.load %arg8[%c0_108, %c0_109, %c0_110] : memref<2x8x128xf32, #tpu.memory_space<vmem>>, vector<1x8x128xf32>
    %134 = vector.shape_cast %133 : vector<1x8x128xf32> to vector<8x128xf32>
    %135 = vector.shape_cast %132 : vector<8x128xf32> to vector<1x8x128xf32>
    tpu.vector_store %arg8[%c0_108, %c0_109, %c0_110], %135 {strides = array<i32>} : memref<2x8x128xf32, #tpu.memory_space<vmem>>, vector<1x8x128xf32>,
    %c1_111 = arith.constant 1 : index
    %c0_112 = arith.constant 0 : index
    %c0_113 = arith.constant 0 : index
    %136 = vector.load %arg8[%c1_111, %c0_112, %c0_113] : memref<2x8x128xf32, #tpu.memory_space<vmem>>, vector<1x8x128xf32>
    %137 = vector.shape_cast %136 : vector<1x8x128xf32> to vector<8x128xf32>
    %138 = tpu.concatenate %132, %137 in 1 : vector<8x128xf32>, vector<8x128xf32> -> vector<8x256xf32>
    %cst_114 = arith.constant dense<0.000000e+00> : vector<8x128xf32>
    %139 = tpu.matmul %138, %4, %cst_114 {dimension_numbers = #tpu.dot_dimension_numbers<[1], [0], [0], [1], [0, 0, 1, 1], [], []>} : vector<8x256xf32>, vector<256x128xf32>, vector<8x128xf32> -> vector<8x128xf32>
    %140 = vector.broadcast %5 : vector<1x128xf32> to vector<8x128xf32>
    %141 = arith.addf %139, %140 : vector<8x128xf32>
    %142 = math.tanh %141 : vector<8x128xf32>
    %c1_115 = arith.constant 1 : index
    %c0_116 = arith.constant 0 : index
    %c0_117 = arith.constant 0 : index
    %143 = vector.load %arg8[%c1_115, %c0_116, %c0_117] : memref<2x8x128xf32, #tpu.memory_space<vmem>>, vector<1x8x128xf32>
    %144 = vector.shape_cast %143 : vector<1x8x128xf32> to vector<8x128xf32>
    %145 = vector.shape_cast %142 : vector<8x128xf32> to vector<1x8x128xf32>
    tpu.vector_store %arg8[%c1_115, %c0_116, %c0_117], %145 {strides = array<i32>} : memref<2x8x128xf32, #tpu.memory_space<vmem>>, vector<1x8x128xf32>,
    %c7 = arith.constant 7 : index
    %c0_118 = arith.constant 0 : index
    %c0_119 = arith.constant 0 : index
    %146 = vector.load %arg1[%c7, %c0_118, %c0_119] : memref<8x8x128xf32, #tpu.memory_space<vmem>>, vector<1x8x128xf32>
    %147 = vector.shape_cast %146 : vector<1x8x128xf32> to vector<8x128xf32>
    %c0_120 = arith.constant 0 : index
    %c0_121 = arith.constant 0 : index
    %c0_122 = arith.constant 0 : index
    %148 = vector.load %arg8[%c0_120, %c0_121, %c0_122] : memref<2x8x128xf32, #tpu.memory_space<vmem>>, vector<1x8x128xf32>
    %149 = vector.shape_cast %148 : vector<1x8x128xf32> to vector<8x128xf32>
    %cst_123 = arith.constant dense<0.000000e+00> : vector<8x128xf32>
    %150 = tpu.matmul %149, %3, %cst_123 {dimension_numbers = #tpu.dot_dimension_numbers<[1], [0], [0], [1], [0, 0, 1, 1], [], []>} : vector<8x128xf32>, vector<128x128xf32>, vector<8x128xf32> -> vector<8x128xf32>
    %151 = arith.addf %147, %150 : vector<8x128xf32>
    %152 = math.tanh %151 : vector<8x128xf32>
    %c0_124 = arith.constant 0 : index
    %c0_125 = arith.constant 0 : index
    %c0_126 = arith.constant 0 : index
    %153 = vector.load %arg8[%c0_124, %c0_125, %c0_126] : memref<2x8x128xf32, #tpu.memory_space<vmem>>, vector<1x8x128xf32>
    %154 = vector.shape_cast %153 : vector<1x8x128xf32> to vector<8x128xf32>
    %155 = vector.shape_cast %152 : vector<8x128xf32> to vector<1x8x128xf32>
    tpu.vector_store %arg8[%c0_124, %c0_125, %c0_126], %155 {strides = array<i32>} : memref<2x8x128xf32, #tpu.memory_space<vmem>>, vector<1x8x128xf32>,
    %c1_127 = arith.constant 1 : index
    %c0_128 = arith.constant 0 : index
    %c0_129 = arith.constant 0 : index
    %156 = vector.load %arg8[%c1_127, %c0_128, %c0_129] : memref<2x8x128xf32, #tpu.memory_space<vmem>>, vector<1x8x128xf32>
    %157 = vector.shape_cast %156 : vector<1x8x128xf32> to vector<8x128xf32>
    %158 = tpu.concatenate %152, %157 in 1 : vector<8x128xf32>, vector<8x128xf32> -> vector<8x256xf32>
    %cst_130 = arith.constant dense<0.000000e+00> : vector<8x128xf32>
    %159 = tpu.matmul %158, %4, %cst_130 {dimension_numbers = #tpu.dot_dimension_numbers<[1], [0], [0], [1], [0, 0, 1, 1], [], []>} : vector<8x256xf32>, vector<256x128xf32>, vector<8x128xf32> -> vector<8x128xf32>
    %160 = vector.broadcast %5 : vector<1x128xf32> to vector<8x128xf32>
    %161 = arith.addf %159, %160 : vector<8x128xf32>
    %162 = math.tanh %161 : vector<8x128xf32>
    %c1_131 = arith.constant 1 : index
    %c0_132 = arith.constant 0 : index
    %c0_133 = arith.constant 0 : index
    %163 = vector.load %arg8[%c1_131, %c0_132, %c0_133] : memref<2x8x128xf32, #tpu.memory_space<vmem>>, vector<1x8x128xf32>
    %164 = vector.shape_cast %163 : vector<1x8x128xf32> to vector<8x128xf32>
    %165 = vector.shape_cast %162 : vector<8x128xf32> to vector<1x8x128xf32>
    tpu.vector_store %arg8[%c1_131, %c0_132, %c0_133], %165 {strides = array<i32>} : memref<2x8x128xf32, #tpu.memory_space<vmem>>, vector<1x8x128xf32>,
    %c0_i32_134 = arith.constant 0 : i32
    %166 = arith.cmpi eq, %arg0, %c0_i32_134 : i32
    %167 = arith.extui %166 : i1 to i32
    %c0_i32_135 = arith.constant 0 : i32
    %168 = arith.cmpi ne, %167, %c0_i32_135 : i32
    scf.if %168 {
      %c0_136 = arith.constant 0 : index
      %c0_137 = arith.constant 0 : index
      %169 = vector.load %arg5[%c0_136, %c0_137] : memref<128x128xf32, #tpu.memory_space<vmem>>, vector<128x128xf32>
      %cst_138 = arith.constant dense<0.000000e+00> : vector<8x128xf32>
      %170 = tpu.matmul %162, %169, %cst_138 {dimension_numbers = #tpu.dot_dimension_numbers<[1], [0], [0], [1], [0, 0, 1, 1], [], []>} : vector<8x128xf32>, vector<128x128xf32>, vector<8x128xf32> -> vector<8x128xf32>
      %c0_139 = arith.constant 0 : index
      %c0_140 = arith.constant 0 : index
      %171 = vector.load %arg6[%c0_139, %c0_140] : memref<1x128xf32, #tpu.memory_space<vmem>>, vector<1x128xf32>
      %172 = vector.broadcast %171 : vector<1x128xf32> to vector<8x128xf32>
      %173 = arith.addf %170, %172 : vector<8x128xf32>
      %c0_141 = arith.constant 0 : index
      %c0_142 = arith.constant 0 : index
      %174 = vector.load %arg7[%c0_141, %c0_142] : memref<8x128xf32, #tpu.memory_space<vmem>>, vector<8x128xf32>
      tpu.vector_store %arg7[%c0_141, %c0_142], %173 {strides = array<i32>} : memref<8x128xf32, #tpu.memory_space<vmem>>, vector<8x128xf32>,
    } else {
    }
    return
  }
  func.func @transform_0(%arg0: i32) -> (i32, i32, i32) {
    %c0_i32 = arith.constant 0 : i32
    %c0_i32_0 = arith.constant 0 : i32
    %c0_i32_1 = arith.constant 0 : i32
    return %arg0, %c0_i32, %c0_i32_0 : i32, i32, i32
  }
  func.func @transform_1(%arg0: i32) -> (i32, i32) {
    %c0_i32 = arith.constant 0 : i32
    %c0_i32_0 = arith.constant 0 : i32
    %c0_i32_1 = arith.constant 0 : i32
    return %c0_i32, %c0_i32_0 : i32, i32
  }
  func.func @transform_2(%arg0: i32) -> (i32, i32) {
    %c0_i32 = arith.constant 0 : i32
    %c0_i32_0 = arith.constant 0 : i32
    %c0_i32_1 = arith.constant 0 : i32
    return %c0_i32, %c0_i32_0 : i32, i32
  }
  func.func @transform_3(%arg0: i32) -> (i32, i32) {
    %c0_i32 = arith.constant 0 : i32
    %c0_i32_0 = arith.constant 0 : i32
    %c0_i32_1 = arith.constant 0 : i32
    return %c0_i32, %c0_i32_0 : i32, i32
  }
  func.func @transform_4(%arg0: i32) -> (i32, i32) {
    %c0_i32 = arith.constant 0 : i32
    %c0_i32_0 = arith.constant 0 : i32
    %c0_i32_1 = arith.constant 0 : i32
    return %c0_i32, %c0_i32_0 : i32, i32
  }
  func.func @transform_5(%arg0: i32) -> (i32, i32) {
    %c0_i32 = arith.constant 0 : i32
    %c0_i32_0 = arith.constant 0 : i32
    %c0_i32_1 = arith.constant 0 : i32
    return %c0_i32, %c0_i32_0 : i32, i32
  }
  func.func @transform_6(%arg0: i32) -> (i32, i32) {
    %c0_i32 = arith.constant 0 : i32
    %c0_i32_0 = arith.constant 0 : i32
    %c0_i32_1 = arith.constant 0 : i32
    return %c0_i32, %c0_i32_0 : i32, i32
  }
}

</mosaic_0001>

<llo_original>
// kernel: tpu_custom_call.1
$region0: #{tpu_custom_call.1}
  #allocation0 [shape = 'u32[]', space=smem, size = 0x4, offset = 0x4, fixed_abs, tag = 'smem constant byte address 0x4 - core index']
  #allocation1 [shape = 'u32[144,128]{1,0:T(1,128)}', space=vmem, size = 0x12000, scoped, tag = 'internal scratch']
  #allocation2 [shape = 'f32[2,8,128]{2,1,0:T(8,128)}', space=vmem, size = 0x2000, scoped, tag = 'scratch operand']
  %s0 = inlined_call_operand.hbm [shape: f32[8,8,128], index: 0, kind: input, shape index: {}]
  %s1 = inlined_call_operand.hbm [shape: f32[128,128], index: 1, kind: input, shape index: {}]
  %s2 = inlined_call_operand.hbm [shape: f32[256,128], index: 2, kind: input, shape index: {}]
  %s3 = inlined_call_operand.vmem [shape: f32[1,128], index: 3, kind: input, shape index: {}]
  %s4 = inlined_call_operand.hbm [shape: f32[128,128], index: 4, kind: input, shape index: {}]
  %s5 = inlined_call_operand.vmem [shape: f32[1,128], index: 5, kind: input, shape index: {}]
  %s6 = inlined_call_operand.hbm [shape: f32[8,128], index: 6, kind: output, shape index: {}]
  %s7 = sld [smem:[#allocation0]]
  $region58: #{tpu_custom_call.1} parent=0
    _
  %s9 = ssub.s32 1, %s7
  %s10 = scalar_select 0, %s9, %s7
  $region1: #{tpu_custom_call.1} parent=0
    #allocation3 [shape = 'u8[32768]{0}', space=vmem, size = 0x8000, scoped, tag = 'input window, operand 0, single buffered']
    #allocation4 [shape = 's32[1]{0}', space=sflag, size = 0x4, scoped, tag = 'scoped memory for tpu_custom_call.1']
    #allocation5 [shape = 's32[1]{0}', space=sflag, size = 0x4, scoped, tag = 'scoped memory for tpu_custom_call.1']
    #allocation6 [shape = 'u8[65536]{0}', space=vmem, size = 0x10000, scoped, tag = 'input window, operand 1, single buffered']
    #allocation7 [shape = 's32[1]{0}', space=sflag, size = 0x4, scoped, tag = 'scoped memory for tpu_custom_call.1']
    #allocation8 [shape = 'u8[131072]{0}', space=vmem, size = 0x20000, scoped, tag = 'input window, operand 2, single buffered']
    #allocation9 [shape = 'u8[65536]{0}', space=vmem, size = 0x10000, scoped, tag = 'input window, operand 4, single buffered']
    #allocation10 [shape = 's32[1]{0}', space=sflag, size = 0x4, scoped, tag = 'scoped memory for tpu_custom_call.1']
    #allocation11 [shape = 'u8[4096]{0}', space=vmem, size = 0x1000, scoped, tag = 'output window, operand 0, single buffered']
    %11 = vsyncpa [#allocation4], 0
    %12 = vsyncpa [#allocation7], 0
    %13 = vsyncpa [#allocation10], 0
    %14 = vsyncpa [#allocation5], 0
    // Predicated region
    $region2: #{tpu_custom_call.1} parent=1 // pred_check
      _
    $region3: #{tpu_custom_call.1} parent=1 // pred_check_branch
      %16 = sbr.rel (0) target = $region5
    $region4: #{tpu_custom_call.1} parent=1 // pred_region
      %s18 = ssub.s32 1024, 1024
      %19 = vsyncadd [#allocation4], %s18
      %s20 = sshll.u32 [#allocation3], 4
      %s21 = int_to_ptr.vmem [resolvable:$true] %s20
      %26 = dma.hbm_to_vmem [thread:$0]  %s0, 1024, %s21, [#allocation4], 128, 128, 8
    $region5: #{tpu_custom_call.1} parent=1 // pred_fallthru
      _
    // Predicated region
    $region6: #{tpu_custom_call.1} parent=1 // pred_check
      _
    $region7: #{tpu_custom_call.1} parent=1 // pred_check_branch
      %28 = sbr.rel (0) target = $region9
    $region8: #{tpu_custom_call.1} parent=1 // pred_region
      %s30 = ssub.s32 2048, 2048
      %31 = vsyncadd [#allocation7], %s30
      %s32 = sshll.u32 [#allocation6], 4
      %s33 = int_to_ptr.vmem [resolvable:$true] %s32
      %38 = dma.hbm_to_vmem [thread:$0]  %s1, 2048, %s33, [#allocation7], 128, 128, 8
    $region9: #{tpu_custom_call.1} parent=1 // pred_fallthru
      _
    // Predicated region
    $region10: #{tpu_custom_call.1} parent=1 // pred_check
      _
    $region11: #{tpu_custom_call.1} parent=1 // pred_check_branch
      %40 = sbr.rel (0) target = $region13
    $region12: #{tpu_custom_call.1} parent=1 // pred_region
      %s42 = ssub.s32 4096, 4096
      %43 = vsyncadd [#allocation7], %s42
      %s44 = sshll.u32 [#allocation8], 4
      %s45 = int_to_ptr.vmem [resolvable:$true] %s44
      %50 = dma.hbm_to_vmem [thread:$0]  %s2, 4096, %s45, [#allocation7], 128, 128, 8
    $region13: #{tpu_custom_call.1} parent=1 // pred_fallthru
      _
    // Predicated region
    $region14: #{tpu_custom_call.1} parent=1 // pred_check
      _
    $region15: #{tpu_custom_call.1} parent=1 // pred_check_branch
      %52 = sbr.rel (0) target = $region17
    $region16: #{tpu_custom_call.1} parent=1 // pred_region
      _
    $region17: #{tpu_custom_call.1} parent=1 // pred_fallthru
      _
    // Predicated region
    $region18: #{tpu_custom_call.1} parent=1 // pred_check
      _
    $region19: #{tpu_custom_call.1} parent=1 // pred_check_branch
      %54 = sbr.rel (0) target = $region21
    $region20: #{tpu_custom_call.1} parent=1 // pred_region
      %s56 = ssub.s32 2048, 2048
      %57 = vsyncadd [#allocation10], %s56
      %s58 = sshll.u32 [#allocation9], 4
      %s59 = int_to_ptr.vmem [resolvable:$true] %s58
      %64 = dma.hbm_to_vmem [thread:$0]  %s4, 2048, %s59, [#allocation10], 128, 128, 8
    $region21: #{tpu_custom_call.1} parent=1 // pred_fallthru
      _
    // Predicated region
    $region22: #{tpu_custom_call.1} parent=1 // pred_check
      _
    $region23: #{tpu_custom_call.1} parent=1 // pred_check_branch
      %66 = sbr.rel (0) target = $region25
    $region24: #{tpu_custom_call.1} parent=1 // pred_region
      _
    $region25: #{tpu_custom_call.1} parent=1 // pred_fallthru
      _
    // Predicated region
    $region26: #{tpu_custom_call.1} parent=1 // pred_check
      _
    $region27: #{tpu_custom_call.1} parent=1 // pred_check_branch
      %68 = sbr.rel (0) target = $region29
    $region28: #{tpu_custom_call.1} parent=1 // pred_region
      %69 = dma.done [#allocation4], 1024
    $region29: #{tpu_custom_call.1} parent=1 // pred_fallthru
      _
    // Predicated region
    $region30: #{tpu_custom_call.1} parent=1 // pred_check
      _
    $region31: #{tpu_custom_call.1} parent=1 // pred_check_branch
      %71 = sbr.rel (0) target = $region33
    $region32: #{tpu_custom_call.1} parent=1 // pred_region
      %72 = dma.done [#allocation7], 2048
    $region33: #{tpu_custom_call.1} parent=1 // pred_fallthru
      _
    // Predicated region
    $region34: #{tpu_custom_call.1} parent=1 // pred_check
      _
    $region35: #{tpu_custom_call.1} parent=1 // pred_check_branch
      %74 = sbr.rel (0) target = $region37
    $region36: #{tpu_custom_call.1} parent=1 // pred_region
      %75 = dma.done [#allocation7], 4096
    $region37: #{tpu_custom_call.1} parent=1 // pred_fallthru
      _
    // Predicated region
    $region38: #{tpu_custom_call.1} parent=1 // pred_check
      _
    $region39: #{tpu_custom_call.1} parent=1 // pred_check_branch
      %77 = sbr.rel (0) target = $region41
    $region40: #{tpu_custom_call.1} parent=1 // pred_region
      %78 = dma.done [#allocation10], 2048
    $region41: #{tpu_custom_call.1} parent=1 // pred_fallthru
      _
    %p79 = scmp.eq.s32.totalorder 0, 0
    // Predicated region
    $region42: #{tpu_custom_call.1} parent=1 // pred_check
      %p80 = pneg %p79
    $region43: #{tpu_custom_call.1} parent=1 // pred_check_branch
      %82 = sbr.rel (%p80) target = $region45
    $region44: #{tpu_custom_call.1} parent=1 // pred_region
      %83 = vst [vmem:[#allocation2] sm:$0xff] 0.0
      %84 = vst [vmem:[#allocation2 + $0x8] sm:$0xff] 0.0
    $region45: #{tpu_custom_call.1} parent=1 // pred_fallthru
      _
    %v85 = vld [vmem:[#allocation6] sm:$0xff]
    %v86 = vld [vmem:[#allocation6 + $0x8] sm:$0xff]
    %v87 = vld [vmem:[#allocation6 + $0x10] sm:$0xff]
    %v88 = vld [vmem:[#allocation6 + $0x18] sm:$0xff]
    %v89 = vld [vmem:[#allocation6 + $0x20] sm:$0xff]
    %v90 = vld [vmem:[#allocation6 + $0x28] sm:$0xff]
    %v91 = vld [vmem:[#allocation6 + $0x30] sm:$0xff]
    %v92 = vld [vmem:[#allocation6 + $0x38] sm:$0xff]
    %v93 = vld [vmem:[#allocation6 + $0x40] sm:$0xff]
    %v94 = vld [vmem:[#allocation6 + $0x48] sm:$0xff]
    %v95 = vld [vmem:[#allocation6 + $0x50] sm:$0xff]
    %v96 = vld [vmem:[#allocation6 + $0x58] sm:$0xff]
    %v97 = vld [vmem:[#allocation6 + $0x60] sm:$0xff]
    %v98 = vld [vmem:[#allocation6 + $0x68] sm:$0xff]
    %v99 = vld [vmem:[#allocation6 + $0x70] sm:$0xff]
    %v100 = vld [vmem:[#allocation6 + $0x78] sm:$0xff]
    %v101 = vld [vmem:[#allocation8] sm:$0xff]
    %v102 = vld [vmem:[#allocation8 + $0x8] sm:$0xff]
    %v103 = vld [vmem:[#allocation8 + $0x10] sm:$0xff]
    %v104 = vld [vmem:[#allocation8 + $0x18] sm:$0xff]
    %v105 = vld [vmem:[#allocation8 + $0x20] sm:$0xff]
    %v106 = vld [vmem:[#allocation8 + $0x28] sm:$0xff]
    %v107 = vld [vmem:[#allocation8 + $0x30] sm:$0xff]
    %v108 = vld [vmem:[#allocation8 + $0x38] sm:$0xff]
    %v109 = vld [vmem:[#allocation8 + $0x40] sm:$0xff]
    %v110 = vld [vmem:[#allocation8 + $0x48] sm:$0xff]
    %v111 = vld [vmem:[#allocation8 + $0x50] sm:$0xff]
    %v112 = vld [vmem:[#allocation8 + $0x58] sm:$0xff]
    %v113 = vld [vmem:[#allocation8 + $0x60] sm:$0xff]
    %v114 = vld [vmem:[#allocation8 + $0x68] sm:$0xff]
    %v115 = vld [vmem:[#allocation8 + $0x70] sm:$0xff]
    %v116 = vld [vmem:[#allocation8 + $0x78] sm:$0xff]
    %v117 = vld [vmem:[#allocation8 + $0x80] sm:$0xff]
    %v118 = vld [vmem:[#allocation8 + $0x88] sm:$0xff]
    %v119 = vld [vmem:[#allocation8 + $0x90] sm:$0xff]
    %v120 = vld [vmem:[#allocation8 + $0x98] sm:$0xff]
    %v121 = vld [vmem:[#allocation8 + $0xa0] sm:$0xff]
    %v122 = vld [vmem:[#allocation8 + $0xa8] sm:$0xff]
    %v123 = vld [vmem:[#allocation8 + $0xb0] sm:$0xff]
    %v124 = vld [vmem:[#allocation8 + $0xb8] sm:$0xff]
    %v125 = vld [vmem:[#allocation8 + $0xc0] sm:$0xff]
    %v126 = vld [vmem:[#allocation8 + $0xc8] sm:$0xff]
    %v127 = vld [vmem:[#allocation8 + $0xd0] sm:$0xff]
    %v128 = vld [vmem:[#allocation8 + $0xd8] sm:$0xff]
    %v129 = vld [vmem:[#allocation8 + $0xe0] sm:$0xff]
    %v130 = vld [vmem:[#allocation8 + $0xe8] sm:$0xff]
    %v131 = vld [vmem:[#allocation8 + $0xf0] sm:$0xff]
    %v132 = vld [vmem:[#allocation8 + $0xf8] sm:$0xff]
    %v133 = vld [vmem:[%s3] sm:$0x1]
    %v134 = vld [vmem:[#allocation3] sm:$0xff]
    %v135 = vld [vmem:[#allocation2] sm:$0xff]
    %136 = vmatprep.subr.mxu0 0.0
    %137 = vmatpush1.msra.mxu0 %v100
    %138 = vmatprep.subr.mxu0 0.0
    %139 = vmatpush1.msra.mxu0 %v99
    %140 = vmatprep.subr.mxu0 0.0
    %141 = vmatpush1.msra.mxu0 %v98
    %142 = vmatprep.subr.mxu0 0.0
    %143 = vmatpush1.msra.mxu0 %v97
    %144 = vmatprep.subr.mxu0 0.0
    %145 = vmatpush1.msra.mxu0 %v96
    %146 = vmatprep.subr.mxu0 0.0
    %147 = vmatpush1.msra.mxu0 %v95
    %148 = vmatprep.subr.mxu0 0.0
    %149 = vmatpush1.msra.mxu0 %v94
    %150 = vmatprep.subr.mxu0 0.0
    %151 = vmatpush1.msra.mxu0 %v93
    %152 = vmatprep.subr.mxu0 0.0
    %153 = vmatpush1.msra.mxu0 %v92
    %154 = vmatprep.subr.mxu0 0.0
    %155 = vmatpush1.msra.mxu0 %v91
    %156 = vmatprep.subr.mxu0 0.0
    %157 = vmatpush1.msra.mxu0 %v90
    %158 = vmatprep.subr.mxu0 0.0
    %159 = vmatpush1.msra.mxu0 %v89
    %160 = vmatprep.subr.mxu0 0.0
    %161 = vmatpush1.msra.mxu0 %v88
    %162 = vmatprep.subr.mxu0 0.0
    %163 = vmatpush1.msra.mxu0 %v87
    %164 = vmatprep.subr.mxu0 0.0
    %165 = vmatpush1.msra.mxu0 %v86
    %166 = vmatprep.subr.mxu0 0.0
    %167 = vmatpush1.msra.mxu0 %v85
    %168 = vmatprep.subr.mxu0 0.0
    %169 = vmatpush2.msra.mxu0 0.0
    %170 = vmatprep.subr.mxu0 0.0
    %171 = vmatpush2.msra.mxu0 0.0
    %172 = vmatprep.subr.mxu0 0.0
    %173 = vmatpush2.msra.mxu0 0.0
    %174 = vmatprep.subr.mxu0 0.0
    %175 = vmatpush2.msra.mxu0 0.0
    %176 = vmatprep.subr.mxu0 0.0
    %177 = vmatpush2.msra.mxu0 0.0
    %178 = vmatprep.subr.mxu0 0.0
    %179 = vmatpush2.msra.mxu0 0.0
    %180 = vmatprep.subr.mxu0 0.0
    %181 = vmatpush2.msra.mxu0 0.0
    %182 = vmatprep.subr.mxu0 0.0
    %183 = vmatpush2.msra.mxu0 0.0
    %184 = vmatprep.subr.mxu0 0.0
    %185 = vmatpush2.msra.mxu0 0.0
    %186 = vmatprep.subr.mxu0 0.0
    %187 = vmatpush2.msra.mxu0 0.0
    %188 = vmatprep.subr.mxu0 0.0
    %189 = vmatpush2.msra.mxu0 0.0
    %190 = vmatprep.subr.mxu0 0.0
    %191 = vmatpush2.msra.mxu0 0.0
    %192 = vmatprep.subr.mxu0 0.0
    %193 = vmatpush2.msra.mxu0 0.0
    %194 = vmatprep.subr.mxu0 0.0
    %195 = vmatpush2.msra.mxu0 0.0
    %196 = vmatprep.subr.mxu0 0.0
    %197 = vmatpush2.msra.mxu0 0.0
    %198 = vmatprep.subr.mxu0 0.0
    %199 = vmatpush2.msra.mxu0 0.0
    %200 = vmatprep.mubr.f32.mxu0 0.0
    %201 = vmatmul.mubr.f32.gmra.mxu0 %v135
    %v202 = vpop.f32.mrf.mxu0
    %v203 = vadd.f32 0.0, %v202
    %v204 = vpop.f32.mrf.mxu0
    %205 = vdwg.mxu0
    %v206 = vadd.f32 %v134, %v203
    %v207 = vtanh.pop %v206
    %208 = vst [vmem:[#allocation2] sm:$0xff] %v207
    %s209 = scalar_lea.vmem [#allocation2], 8
    %v210 = vld [vmem:[%s209] sm:$0xff]
    %v212 = vlaneseq
    %v213 = vshrl.u32 %v212, 7
    %v214 = vsub.s32 0, %v213
    %v215 = vrot.slane %v133, %v214
    %217 = vmatprep.subr.mxu0 0.0
    %218 = vmatpush1.msra.mxu0 %v116
    %219 = vmatprep.subr.mxu0 0.0
    %220 = vmatpush1.msra.mxu0 %v115
    %221 = vmatprep.subr.mxu0 0.0
    %222 = vmatpush1.msra.mxu0 %v114
    %223 = vmatprep.subr.mxu0 0.0
    %224 = vmatpush1.msra.mxu0 %v113
    %225 = vmatprep.subr.mxu0 0.0
    %226 = vmatpush1.msra.mxu0 %v112
    %227 = vmatprep.subr.mxu0 0.0
    %228 = vmatpush1.msra.mxu0 %v111
    %229 = vmatprep.subr.mxu0 0.0
    %230 = vmatpush1.msra.mxu0 %v110
    %231 = vmatprep.subr.mxu0 0.0
    %232 = vmatpush1.msra.mxu0 %v109
    %233 = vmatprep.subr.mxu0 0.0
    %234 = vmatpush1.msra.mxu0 %v108
    %235 = vmatprep.subr.mxu0 0.0
    %236 = vmatpush1.msra.mxu0 %v107
    %237 = vmatprep.subr.mxu0 0.0
    %238 = vmatpush1.msra.mxu0 %v106
    %239 = vmatprep.subr.mxu0 0.0
    %240 = vmatpush1.msra.mxu0 %v105
    %241 = vmatprep.subr.mxu0 0.0
    %242 = vmatpush1.msra.mxu0 %v104
    %243 = vmatprep.subr.mxu0 0.0
    %244 = vmatpush1.msra.mxu0 %v103
    %245 = vmatprep.subr.mxu0 0.0
    %246 = vmatpush1.msra.mxu0 %v102
    %247 = vmatprep.subr.mxu0 0.0
    %248 = vmatpush1.msra.mxu0 %v101
    %249 = vmatprep.subr.mxu0 0.0
    %250 = vmatpush2.msra.mxu0 %v132
    %251 = vmatprep.subr.mxu0 0.0
    %252 = vmatpush2.msra.mxu0 %v131
    %253 = vmatprep.subr.mxu0 0.0
    %254 = vmatpush2.msra.mxu0 %v130
    %255 = vmatprep.subr.mxu0 0.0
    %256 = vmatpush2.msra.mxu0 %v129
    %257 = vmatprep.subr.mxu0 0.0
    %258 = vmatpush2.msra.mxu0 %v128
    %259 = vmatprep.subr.mxu0 0.0
    %260 = vmatpush2.msra.mxu0 %v127
    %261 = vmatprep.subr.mxu0 0.0
    %262 = vmatpush2.msra.mxu0 %v126
    %263 = vmatprep.subr.mxu0 0.0
    %264 = vmatpush2.msra.mxu0 %v125
    %265 = vmatprep.subr.mxu0 0.0
    %266 = vmatpush2.msra.mxu0 %v124
    %267 = vmatprep.subr.mxu0 0.0
    %268 = vmatpush2.msra.mxu0 %v123
    %269 = vmatprep.subr.mxu0 0.0
    %270 = vmatpush2.msra.mxu0 %v122
    %271 = vmatprep.subr.mxu0 0.0
    %272 = vmatpush2.msra.mxu0 %v121
    %273 = vmatprep.subr.mxu0 0.0
    %274 = vmatpush2.msra.mxu0 %v120
    %275 = vmatprep.subr.mxu0 0.0
    %276 = vmatpush2.msra.mxu0 %v119
    %277 = vmatprep.subr.mxu0 0.0
    %278 = vmatpush2.msra.mxu0 %v118
    %279 = vmatprep.subr.mxu0 0.0
    %280 = vmatpush2.msra.mxu0 %v117
    %281 = vmatprep.mubr.f32.mxu0 %v210
    %282 = vmatmul.mubr.f32.gmra.mxu0 %v207
    %v283 = vpop.f32.mrf.mxu0
    %v284 = vadd.f32 %v215, %v283
    %v285 = vpop.f32.mrf.mxu0
    %286 = vdwg.mxu0
    %v287 = vtanh.pop %v284
    %288 = vst [vmem:[%s209] sm:$0xff] %v287
    %s289 = scalar_lea.vmem [#allocation3], 8
    %v290 = vld [vmem:[%s289] sm:$0xff]
    %v291 = vld [vmem:[#allocation2] sm:$0xff]
    %292 = vmatprep.subr.mxu0 0.0
    %293 = vmatpush1.msra.mxu0 %v100
    %294 = vmatprep.subr.mxu0 0.0
    %295 = vmatpush1.msra.mxu0 %v99
    %296 = vmatprep.subr.mxu0 0.0
    %297 = vmatpush1.msra.mxu0 %v98
    %298 = vmatprep.subr.mxu0 0.0
    %299 = vmatpush1.msra.mxu0 %v97
    %300 = vmatprep.subr.mxu0 0.0
    %301 = vmatpush1.msra.mxu0 %v96
    %302 = vmatprep.subr.mxu0 0.0
    %303 = vmatpush1.msra.mxu0 %v95
    %304 = vmatprep.subr.mxu0 0.0
    %305 = vmatpush1.msra.mxu0 %v94
    %306 = vmatprep.subr.mxu0 0.0
    %307 = vmatpush1.msra.mxu0 %v93
    %308 = vmatprep.subr.mxu0 0.0
    %309 = vmatpush1.msra.mxu0 %v92
    %310 = vmatprep.subr.mxu0 0.0
    %311 = vmatpush1.msra.mxu0 %v91
    %312 = vmatprep.subr.mxu0 0.0
    %313 = vmatpush1.msra.mxu0 %v90
    %314 = vmatprep.subr.mxu0 0.0
    %315 = vmatpush1.msra.mxu0 %v89
    %316 = vmatprep.subr.mxu0 0.0
    %317 = vmatpush1.msra.mxu0 %v88
    %318 = vmatprep.subr.mxu0 0.0
    %319 = vmatpush1.msra.mxu0 %v87
    %320 = vmatprep.subr.mxu0 0.0
    %321 = vmatpush1.msra.mxu0 %v86
    %322 = vmatprep.subr.mxu0 0.0
    %323 = vmatpush1.msra.mxu0 %v85
    %324 = vmatprep.subr.mxu0 0.0
    %325 = vmatpush2.msra.mxu0 0.0
    %326 = vmatprep.subr.mxu0 0.0
    %327 = vmatpush2.msra.mxu0 0.0
    %328 = vmatprep.subr.mxu0 0.0
    %329 = vmatpush2.msra.mxu0 0.0
    %330 = vmatprep.subr.mxu0 0.0
    %331 = vmatpush2.msra.mxu0 0.0
    %332 = vmatprep.subr.mxu0 0.0
    %333 = vmatpush2.msra.mxu0 0.0
    %334 = vmatprep.subr.mxu0 0.0
    %335 = vmatpush2.msra.mxu0 0.0
    %336 = vmatprep.subr.mxu0 0.0
    %337 = vmatpush2.msra.mxu0 0.0
    %338 = vmatprep.subr.mxu0 0.0
    %339 = vmatpush2.msra.mxu0 0.0
    %340 = vmatprep.subr.mxu0 0.0
    %341 = vmatpush2.msra.mxu0 0.0
    %342 = vmatprep.subr.mxu0 0.0
    %343 = vmatpush2.msra.mxu0 0.0
    %344 = vmatprep.subr.mxu0 0.0
    %345 = vmatpush2.msra.mxu0 0.0
    %346 = vmatprep.subr.mxu0 0.0
    %347 = vmatpush2.msra.mxu0 0.0
    %348 = vmatprep.subr.mxu0 0.0
    %349 = vmatpush2.msra.mxu0 0.0
    %350 = vmatprep.subr.mxu0 0.0
    %351 = vmatpush2.msra.mxu0 0.0
    %352 = vmatprep.subr.mxu0 0.0
    %353 = vmatpush2.msra.mxu0 0.0
    %354 = vmatprep.subr.mxu0 0.0
    %355 = vmatpush2.msra.mxu0 0.0
    %356 = vmatprep.mubr.f32.mxu0 0.0
    %357 = vmatmul.mubr.f32.gmra.mxu0 %v291
    %v358 = vpop.f32.mrf.mxu0
    %v359 = vadd.f32 0.0, %v358
    %v360 = vpop.f32.mrf.mxu0
    %361 = vdwg.mxu0
    %v362 = vadd.f32 %v290, %v359
    %v363 = vtanh.pop %v362
    %364 = vst [vmem:[#allocation2] sm:$0xff] %v363
    %v365 = vld [vmem:[%s209] sm:$0xff]
    %366 = vmatprep.subr.mxu0 0.0
    %367 = vmatpush1.msra.mxu0 %v116
    %368 = vmatprep.subr.mxu0 0.0
    %369 = vmatpush1.msra.mxu0 %v115
    %370 = vmatprep.subr.mxu0 0.0
    %371 = vmatpush1.msra.mxu0 %v114
    %372 = vmatprep.subr.mxu0 0.0
    %373 = vmatpush1.msra.mxu0 %v113
    %374 = vmatprep.subr.mxu0 0.0
    %375 = vmatpush1.msra.mxu0 %v112
    %376 = vmatprep.subr.mxu0 0.0
    %377 = vmatpush1.msra.mxu0 %v111
    %378 = vmatprep.subr.mxu0 0.0
    %379 = vmatpush1.msra.mxu0 %v110
    %380 = vmatprep.subr.mxu0 0.0
    %381 = vmatpush1.msra.mxu0 %v109
    %382 = vmatprep.subr.mxu0 0.0
    %383 = vmatpush1.msra.mxu0 %v108
    %384 = vmatprep.subr.mxu0 0.0
    %385 = vmatpush1.msra.mxu0 %v107
    %386 = vmatprep.subr.mxu0 0.0
    %387 = vmatpush1.msra.mxu0 %v106
    %388 = vmatprep.subr.mxu0 0.0
    %389 = vmatpush1.msra.mxu0 %v105
    %390 = vmatprep.subr.mxu0 0.0
    %391 = vmatpush1.msra.mxu0 %v104
    %392 = vmatprep.subr.mxu0 0.0
    %393 = vmatpush1.msra.mxu0 %v103
    %394 = vmatprep.subr.mxu0 0.0
    %395 = vmatpush1.msra.mxu0 %v102
    %396 = vmatprep.subr.mxu0 0.0
    %397 = vmatpush1.msra.mxu0 %v101
    %398 = vmatprep.subr.mxu0 0.0
    %399 = vmatpush2.msra.mxu0 %v132
    %400 = vmatprep.subr.mxu0 0.0
    %401 = vmatpush2.msra.mxu0 %v131
    %402 = vmatprep.subr.mxu0 0.0
    %403 = vmatpush2.msra.mxu0 %v130
    %404 = vmatprep.subr.mxu0 0.0
    %405 = vmatpush2.msra.mxu0 %v129
    %406 = vmatprep.subr.mxu0 0.0
    %407 = vmatpush2.msra.mxu0 %v128
    %408 = vmatprep.subr.mxu0 0.0
    %409 = vmatpush2.msra.mxu0 %v127
    %410 = vmatprep.subr.mxu0 0.0
    %411 = vmatpush2.msra.mxu0 %v126
    %412 = vmatprep.subr.mxu0 0.0
    %413 = vmatpush2.msra.mxu0 %v125
    %414 = vmatprep.subr.mxu0 0.0
    %415 = vmatpush2.msra.mxu0 %v124
    %416 = vmatprep.subr.mxu0 0.0
    %417 = vmatpush2.msra.mxu0 %v123
    %418 = vmatprep.subr.mxu0 0.0
    %419 = vmatpush2.msra.mxu0 %v122
    %420 = vmatprep.subr.mxu0 0.0
    %421 = vmatpush2.msra.mxu0 %v121
    %422 = vmatprep.subr.mxu0 0.0
    %423 = vmatpush2.msra.mxu0 %v120
    %424 = vmatprep.subr.mxu0 0.0
    %425 = vmatpush2.msra.mxu0 %v119
    %426 = vmatprep.subr.mxu0 0.0
    %427 = vmatpush2.msra.mxu0 %v118
    %428 = vmatprep.subr.mxu0 0.0
    %429 = vmatpush2.msra.mxu0 %v117
    %430 = vmatprep.mubr.f32.mxu0 %v365
    %431 = vmatmul.mubr.f32.gmra.mxu0 %v363
    %v432 = vpop.f32.mrf.mxu0
    %v433 = vadd.f32 %v215, %v432
    %v434 = vpop.f32.mrf.mxu0
    %435 = vdwg.mxu0
    %v436 = vtanh.pop %v433
    %437 = vst [vmem:[%s209] sm:$0xff] %v436
    %s438 = scalar_lea.vmem [#allocation3], 16
    %v439 = vld [vmem:[%s438] sm:$0xff]
    %v440 = vld [vmem:[#allocation2] sm:$0xff]
    %441 = vmatprep.subr.mxu0 0.0
    %442 = vmatpush1.msra.mxu0 %v100
    %443 = vmatprep.subr.mxu0 0.0
    %444 = vmatpush1.msra.mxu0 %v99
    %445 = vmatprep.subr.mxu0 0.0
    %446 = vmatpush1.msra.mxu0 %v98
    %447 = vmatprep.subr.mxu0 0.0
    %448 = vmatpush1.msra.mxu0 %v97
    %449 = vmatprep.subr.mxu0 0.0
    %450 = vmatpush1.msra.mxu0 %v96
    %451 = vmatprep.subr.mxu0 0.0
    %452 = vmatpush1.msra.mxu0 %v95
    %453 = vmatprep.subr.mxu0 0.0
    %454 = vmatpush1.msra.mxu0 %v94
    %455 = vmatprep.subr.mxu0 0.0
    %456 = vmatpush1.msra.mxu0 %v93
    %457 = vmatprep.subr.mxu0 0.0
    %458 = vmatpush1.msra.mxu0 %v92
    %459 = vmatprep.subr.mxu0 0.0
    %460 = vmatpush1.msra.mxu0 %v91
    %461 = vmatprep.subr.mxu0 0.0
    %462 = vmatpush1.msra.mxu0 %v90
    %463 = vmatprep.subr.mxu0 0.0
    %464 = vmatpush1.msra.mxu0 %v89
    %465 = vmatprep.subr.mxu0 0.0
    %466 = vmatpush1.msra.mxu0 %v88
    %467 = vmatprep.subr.mxu0 0.0
    %468 = vmatpush1.msra.mxu0 %v87
    %469 = vmatprep.subr.mxu0 0.0
    %470 = vmatpush1.msra.mxu0 %v86
    %471 = vmatprep.subr.mxu0 0.0
    %472 = vmatpush1.msra.mxu0 %v85
    %473 = vmatprep.subr.mxu0 0.0
    %474 = vmatpush2.msra.mxu0 0.0
    %475 = vmatprep.subr.mxu0 0.0
    %476 = vmatpush2.msra.mxu0 0.0
    %477 = vmatprep.subr.mxu0 0.0
    %478 = vmatpush2.msra.mxu0 0.0
    %479 = vmatprep.subr.mxu0 0.0
    %480 = vmatpush2.msra.mxu0 0.0
    %481 = vmatprep.subr.mxu0 0.0
    %482 = vmatpush2.msra.mxu0 0.0
    %483 = vmatprep.subr.mxu0 0.0
    %484 = vmatpush2.msra.mxu0 0.0
    %485 = vmatprep.subr.mxu0 0.0
    %486 = vmatpush2.msra.mxu0 0.0
    %487 = vmatprep.subr.mxu0 0.0
    %488 = vmatpush2.msra.mxu0 0.0
    %489 = vmatprep.subr.mxu0 0.0
    %490 = vmatpush2.msra.mxu0 0.0
    %491 = vmatprep.subr.mxu0 0.0
    %492 = vmatpush2.msra.mxu0 0.0
    %493 = vmatprep.subr.mxu0 0.0
    %494 = vmatpush2.msra.mxu0 0.0
    %495 = vmatprep.subr.mxu0 0.0
    %496 = vmatpush2.msra.mxu0 0.0
    %497 = vmatprep.subr.mxu0 0.0
    %498 = vmatpush2.msra.mxu0 0.0
    %499 = vmatprep.subr.mxu0 0.0
    %500 = vmatpush2.msra.mxu0 0.0
    %501 = vmatprep.subr.mxu0 0.0
    %502 = vmatpush2.msra.mxu0 0.0
    %503 = vmatprep.subr.mxu0 0.0
    %504 = vmatpush2.msra.mxu0 0.0
    %505 = vmatprep.mubr.f32.mxu0 0.0
    %506 = vmatmul.mubr.f32.gmra.mxu0 %v440
    %v507 = vpop.f32.mrf.mxu0
    %v508 = vadd.f32 0.0, %v507
    %v509 = vpop.f32.mrf.mxu0
    %510 = vdwg.mxu0
    %v511 = vadd.f32 %v439, %v508
    %v512 = vtanh.pop %v511
    %513 = vst [vmem:[#allocation2] sm:$0xff] %v512
    %v514 = vld [vmem:[%s209] sm:$0xff]
    %515 = vmatprep.subr.mxu0 0.0
    %516 = vmatpush1.msra.mxu0 %v116
    %517 = vmatprep.subr.mxu0 0.0
    %518 = vmatpush1.msra.mxu0 %v115
    %519 = vmatprep.subr.mxu0 0.0
    %520 = vmatpush1.msra.mxu0 %v114
    %521 = vmatprep.subr.mxu0 0.0
    %522 = vmatpush1.msra.mxu0 %v113
    %523 = vmatprep.subr.mxu0 0.0
    %524 = vmatpush1.msra.mxu0 %v112
    %525 = vmatprep.subr.mxu0 0.0
    %526 = vmatpush1.msra.mxu0 %v111
    %527 = vmatprep.subr.mxu0 0.0
    %528 = vmatpush1.msra.mxu0 %v110
    %529 = vmatprep.subr.mxu0 0.0
    %530 = vmatpush1.msra.mxu0 %v109
    %531 = vmatprep.subr.mxu0 0.0
    %532 = vmatpush1.msra.mxu0 %v108
    %533 = vmatprep.subr.mxu0 0.0
    %534 = vmatpush1.msra.mxu0 %v107
    %535 = vmatprep.subr.mxu0 0.0
    %536 = vmatpush1.msra.mxu0 %v106
    %537 = vmatprep.subr.mxu0 0.0
    %538 = vmatpush1.msra.mxu0 %v105
    %539 = vmatprep.subr.mxu0 0.0
    %540 = vmatpush1.msra.mxu0 %v104
    %541 = vmatprep.subr.mxu0 0.0
    %542 = vmatpush1.msra.mxu0 %v103
    %543 = vmatprep.subr.mxu0 0.0
    %544 = vmatpush1.msra.mxu0 %v102
    %545 = vmatprep.subr.mxu0 0.0
    %546 = vmatpush1.msra.mxu0 %v101
    %547 = vmatprep.subr.mxu0 0.0
    %548 = vmatpush2.msra.mxu0 %v132
    %549 = vmatprep.subr.mxu0 0.0
    %550 = vmatpush2.msra.mxu0 %v131
    %551 = vmatprep.subr.mxu0 0.0
    %552 = vmatpush2.msra.mxu0 %v130
    %553 = vmatprep.subr.mxu0 0.0
    %554 = vmatpush2.msra.mxu0 %v129
    %555 = vmatprep.subr.mxu0 0.0
    %556 = vmatpush2.msra.mxu0 %v128
    %557 = vmatprep.subr.mxu0 0.0
    %558 = vmatpush2.msra.mxu0 %v127
    %559 = vmatprep.subr.mxu0 0.0
    %560 = vmatpush2.msra.mxu0 %v126
    %561 = vmatprep.subr.mxu0 0.0
    %562 = vmatpush2.msra.mxu0 %v125
    %563 = vmatprep.subr.mxu0 0.0
    %564 = vmatpush2.msra.mxu0 %v124
    %565 = vmatprep.subr.mxu0 0.0
    %566 = vmatpush2.msra.mxu0 %v123
    %567 = vmatprep.subr.mxu0 0.0
    %568 = vmatpush2.msra.mxu0 %v122
    %569 = vmatprep.subr.mxu0 0.0
    %570 = vmatpush2.msra.mxu0 %v121
    %571 = vmatprep.subr.mxu0 0.0
    %572 = vmatpush2.msra.mxu0 %v120
    %573 = vmatprep.subr.mxu0 0.0
    %574 = vmatpush2.msra.mxu0 %v119
    %575 = vmatprep.subr.mxu0 0.0
    %576 = vmatpush2.msra.mxu0 %v118
    %577 = vmatprep.subr.mxu0 0.0
    %578 = vmatpush2.msra.mxu0 %v117
    %579 = vmatprep.mubr.f32.mxu0 %v514
    %580 = vmatmul.mubr.f32.gmra.mxu0 %v512
    %v581 = vpop.f32.mrf.mxu0
    %v582 = vadd.f32 %v215, %v581
    %v583 = vpop.f32.mrf.mxu0
    %584 = vdwg.mxu0
    %v585 = vtanh.pop %v582
    %586 = vst [vmem:[%s209] sm:$0xff] %v585
    %s587 = scalar_lea.vmem [#allocation3], 24
    %v588 = vld [vmem:[%s587] sm:$0xff]
    %v589 = vld [vmem:[#allocation2] sm:$0xff]
    %590 = vmatprep.subr.mxu0 0.0
    %591 = vmatpush1.msra.mxu0 %v100
    %592 = vmatprep.subr.mxu0 0.0
    %593 = vmatpush1.msra.mxu0 %v99
    %594 = vmatprep.subr.mxu0 0.0
    %595 = vmatpush1.msra.mxu0 %v98
    %596 = vmatprep.subr.mxu0 0.0
    %597 = vmatpush1.msra.mxu0 %v97
    %598 = vmatprep.subr.mxu0 0.0
    %599 = vmatpush1.msra.mxu0 %v96
    %600 = vmatprep.subr.mxu0 0.0
    %601 = vmatpush1.msra.mxu0 %v95
    %602 = vmatprep.subr.mxu0 0.0
    %603 = vmatpush1.msra.mxu0 %v94
    %604 = vmatprep.subr.mxu0 0.0
    %605 = vmatpush1.msra.mxu0 %v93
    %606 = vmatprep.subr.mxu0 0.0
    %607 = vmatpush1.msra.mxu0 %v92
    %608 = vmatprep.subr.mxu0 0.0
    %609 = vmatpush1.msra.mxu0 %v91
    %610 = vmatprep.subr.mxu0 0.0
    %611 = vmatpush1.msra.mxu0 %v90
    %612 = vmatprep.subr.mxu0 0.0
    %613 = vmatpush1.msra.mxu0 %v89
    %614 = vmatprep.subr.mxu0 0.0
    %615 = vmatpush1.msra.mxu0 %v88
    %616 = vmatprep.subr.mxu0 0.0
    %617 = vmatpush1.msra.mxu0 %v87
    %618 = vmatprep.subr.mxu0 0.0
    %619 = vmatpush1.msra.mxu0 %v86
    %620 = vmatprep.subr.mxu0 0.0
    %621 = vmatpush1.msra.mxu0 %v85
    %622 = vmatprep.subr.mxu0 0.0
    %623 = vmatpush2.msra.mxu0 0.0
    %624 = vmatprep.subr.mxu0 0.0
    %625 = vmatpush2.msra.mxu0 0.0
    %626 = vmatprep.subr.mxu0 0.0
    %627 = vmatpush2.msra.mxu0 0.0
    %628 = vmatprep.subr.mxu0 0.0
    %629 = vmatpush2.msra.mxu0 0.0
    %630 = vmatprep.subr.mxu0 0.0
    %631 = vmatpush2.msra.mxu0 0.0
    %632 = vmatprep.subr.mxu0 0.0
    %633 = vmatpush2.msra.mxu0 0.0
    %634 = vmatprep.subr.mxu0 0.0
    %635 = vmatpush2.msra.mxu0 0.0
    %636 = vmatprep.subr.mxu0 0.0
    %637 = vmatpush2.msra.mxu0 0.0
    %638 = vmatprep.subr.mxu0 0.0
    %639 = vmatpush2.msra.mxu0 0.0
    %640 = vmatprep.subr.mxu0 0.0
    %641 = vmatpush2.msra.mxu0 0.0
    %642 = vmatprep.subr.mxu0 0.0
    %643 = vmatpush2.msra.mxu0 0.0
    %644 = vmatprep.subr.mxu0 0.0
    %645 = vmatpush2.msra.mxu0 0.0
    %646 = vmatprep.subr.mxu0 0.0
    %647 = vmatpush2.msra.mxu0 0.0
    %648 = vmatprep.subr.mxu0 0.0
    %649 = vmatpush2.msra.mxu0 0.0
    %650 = vmatprep.subr.mxu0 0.0
    %651 = vmatpush2.msra.mxu0 0.0
    %652 = vmatprep.subr.mxu0 0.0
    %653 = vmatpush2.msra.mxu0 0.0
    %654 = vmatprep.mubr.f32.mxu0 0.0
    %655 = vmatmul.mubr.f32.gmra.mxu0 %v589
    %v656 = vpop.f32.mrf.mxu0
    %v657 = vadd.f32 0.0, %v656
    %v658 = vpop.f32.mrf.mxu0
    %659 = vdwg.mxu0
    %v660 = vadd.f32 %v588, %v657
    %v661 = vtanh.pop %v660
    %662 = vst [vmem:[#allocation2] sm:$0xff] %v661
    %v663 = vld [vmem:[%s209] sm:$0xff]
    %664 = vmatprep.subr.mxu0 0.0
    %665 = vmatpush1.msra.mxu0 %v116
    %666 = vmatprep.subr.mxu0 0.0
    %667 = vmatpush1.msra.mxu0 %v115
    %668 = vmatprep.subr.mxu0 0.0
    %669 = vmatpush1.msra.mxu0 %v114
    %670 = vmatprep.subr.mxu0 0.0
    %671 = vmatpush1.msra.mxu0 %v113
    %672 = vmatprep.subr.mxu0 0.0
    %673 = vmatpush1.msra.mxu0 %v112
    %674 = vmatprep.subr.mxu0 0.0
    %675 = vmatpush1.msra.mxu0 %v111
    %676 = vmatprep.subr.mxu0 0.0
    %677 = vmatpush1.msra.mxu0 %v110
    %678 = vmatprep.subr.mxu0 0.0
    %679 = vmatpush1.msra.mxu0 %v109
    %680 = vmatprep.subr.mxu0 0.0
    %681 = vmatpush1.msra.mxu0 %v108
    %682 = vmatprep.subr.mxu0 0.0
    %683 = vmatpush1.msra.mxu0 %v107
    %684 = vmatprep.subr.mxu0 0.0
    %685 = vmatpush1.msra.mxu0 %v106
    %686 = vmatprep.subr.mxu0 0.0
    %687 = vmatpush1.msra.mxu0 %v105
    %688 = vmatprep.subr.mxu0 0.0
    %689 = vmatpush1.msra.mxu0 %v104
    %690 = vmatprep.subr.mxu0 0.0
    %691 = vmatpush1.msra.mxu0 %v103
    %692 = vmatprep.subr.mxu0 0.0
    %693 = vmatpush1.msra.mxu0 %v102
    %694 = vmatprep.subr.mxu0 0.0
    %695 = vmatpush1.msra.mxu0 %v101
    %696 = vmatprep.subr.mxu0 0.0
    %697 = vmatpush2.msra.mxu0 %v132
    %698 = vmatprep.subr.mxu0 0.0
    %699 = vmatpush2.msra.mxu0 %v131
    %700 = vmatprep.subr.mxu0 0.0
    %701 = vmatpush2.msra.mxu0 %v130
    %702 = vmatprep.subr.mxu0 0.0
    %703 = vmatpush2.msra.mxu0 %v129
    %704 = vmatprep.subr.mxu0 0.0
    %705 = vmatpush2.msra.mxu0 %v128
    %706 = vmatprep.subr.mxu0 0.0
    %707 = vmatpush2.msra.mxu0 %v127
    %708 = vmatprep.subr.mxu0 0.0
    %709 = vmatpush2.msra.mxu0 %v126
    %710 = vmatprep.subr.mxu0 0.0
    %711 = vmatpush2.msra.mxu0 %v125
    %712 = vmatprep.subr.mxu0 0.0
    %713 = vmatpush2.msra.mxu0 %v124
    %714 = vmatprep.subr.mxu0 0.0
    %715 = vmatpush2.msra.mxu0 %v123
    %716 = vmatprep.subr.mxu0 0.0
    %717 = vmatpush2.msra.mxu0 %v122
    %718 = vmatprep.subr.mxu0 0.0
    %719 = vmatpush2.msra.mxu0 %v121
    %720 = vmatprep.subr.mxu0 0.0
    %721 = vmatpush2.msra.mxu0 %v120
    %722 = vmatprep.subr.mxu0 0.0
    %723 = vmatpush2.msra.mxu0 %v119
    %724 = vmatprep.subr.mxu0 0.0
    %725 = vmatpush2.msra.mxu0 %v118
    %726 = vmatprep.subr.mxu0 0.0
    %727 = vmatpush2.msra.mxu0 %v117
    %728 = vmatprep.mubr.f32.mxu0 %v663
    %729 = vmatmul.mubr.f32.gmra.mxu0 %v661
    %v730 = vpop.f32.mrf.mxu0
    %v731 = vadd.f32 %v215, %v730
    %v732 = vpop.f32.mrf.mxu0
    %733 = vdwg.mxu0
    %v734 = vtanh.pop %v731
    %735 = vst [vmem:[%s209] sm:$0xff] %v734
    %s736 = scalar_lea.vmem [#allocation3], 32
    %v737 = vld [vmem:[%s736] sm:$0xff]
    %v738 = vld [vmem:[#allocation2] sm:$0xff]
    %739 = vmatprep.subr.mxu0 0.0
    %740 = vmatpush1.msra.mxu0 %v100
    %741 = vmatprep.subr.mxu0 0.0
    %742 = vmatpush1.msra.mxu0 %v99
    %743 = vmatprep.subr.mxu0 0.0
    %744 = vmatpush1.msra.mxu0 %v98
    %745 = vmatprep.subr.mxu0 0.0
    %746 = vmatpush1.msra.mxu0 %v97
    %747 = vmatprep.subr.mxu0 0.0
    %748 = vmatpush1.msra.mxu0 %v96
    %749 = vmatprep.subr.mxu0 0.0
    %750 = vmatpush1.msra.mxu0 %v95
    %751 = vmatprep.subr.mxu0 0.0
    %752 = vmatpush1.msra.mxu0 %v94
    %753 = vmatprep.subr.mxu0 0.0
    %754 = vmatpush1.msra.mxu0 %v93
    %755 = vmatprep.subr.mxu0 0.0
    %756 = vmatpush1.msra.mxu0 %v92
    %757 = vmatprep.subr.mxu0 0.0
    %758 = vmatpush1.msra.mxu0 %v91
    %759 = vmatprep.subr.mxu0 0.0
    %760 = vmatpush1.msra.mxu0 %v90
    %761 = vmatprep.subr.mxu0 0.0
    %762 = vmatpush1.msra.mxu0 %v89
    %763 = vmatprep.subr.mxu0 0.0
    %764 = vmatpush1.msra.mxu0 %v88
    %765 = vmatprep.subr.mxu0 0.0
    %766 = vmatpush1.msra.mxu0 %v87
    %767 = vmatprep.subr.mxu0 0.0
    %768 = vmatpush1.msra.mxu0 %v86
    %769 = vmatprep.subr.mxu0 0.0
    %770 = vmatpush1.msra.mxu0 %v85
    %771 = vmatprep.subr.mxu0 0.0
    %772 = vmatpush2.msra.mxu0 0.0
    %773 = vmatprep.subr.mxu0 0.0
    %774 = vmatpush2.msra.mxu0 0.0
    %775 = vmatprep.subr.mxu0 0.0
    %776 = vmatpush2.msra.mxu0 0.0
    %777 = vmatprep.subr.mxu0 0.0
    %778 = vmatpush2.msra.mxu0 0.0
    %779 = vmatprep.subr.mxu0 0.0
    %780 = vmatpush2.msra.mxu0 0.0
    %781 = vmatprep.subr.mxu0 0.0
    %782 = vmatpush2.msra.mxu0 0.0
    %783 = vmatprep.subr.mxu0 0.0
    %784 = vmatpush2.msra.mxu0 0.0
    %785 = vmatprep.subr.mxu0 0.0
    %786 = vmatpush2.msra.mxu0 0.0
    %787 = vmatprep.subr.mxu0 0.0
    %788 = vmatpush2.msra.mxu0 0.0
    %789 = vmatprep.subr.mxu0 0.0
    %790 = vmatpush2.msra.mxu0 0.0
    %791 = vmatprep.subr.mxu0 0.0
    %792 = vmatpush2.msra.mxu0 0.0
    %793 = vmatprep.subr.mxu0 0.0
    %794 = vmatpush2.msra.mxu0 0.0
    %795 = vmatprep.subr.mxu0 0.0
    %796 = vmatpush2.msra.mxu0 0.0
    %797 = vmatprep.subr.mxu0 0.0
    %798 = vmatpush2.msra.mxu0 0.0
    %799 = vmatprep.subr.mxu0 0.0
    %800 = vmatpush2.msra.mxu0 0.0
    %801 = vmatprep.subr.mxu0 0.0
    %802 = vmatpush2.msra.mxu0 0.0
    %803 = vmatprep.mubr.f32.mxu0 0.0
    %804 = vmatmul.mubr.f32.gmra.mxu0 %v738
    %v805 = vpop.f32.mrf.mxu0
    %v806 = vadd.f32 0.0, %v805
    %v807 = vpop.f32.mrf.mxu0
    %808 = vdwg.mxu0
    %v809 = vadd.f32 %v737, %v806
    %v810 = vtanh.pop %v809
    %811 = vst [vmem:[#allocation2] sm:$0xff] %v810
    %v812 = vld [vmem:[%s209] sm:$0xff]
    %813 = vmatprep.subr.mxu0 0.0
    %814 = vmatpush1.msra.mxu0 %v116
    %815 = vmatprep.subr.mxu0 0.0
    %816 = vmatpush1.msra.mxu0 %v115
    %817 = vmatprep.subr.mxu0 0.0
    %818 = vmatpush1.msra.mxu0 %v114
    %819 = vmatprep.subr.mxu0 0.0
    %820 = vmatpush1.msra.mxu0 %v113
    %821 = vmatprep.subr.mxu0 0.0
    %822 = vmatpush1.msra.mxu0 %v112
    %823 = vmatprep.subr.mxu0 0.0
    %824 = vmatpush1.msra.mxu0 %v111
    %825 = vmatprep.subr.mxu0 0.0
    %826 = vmatpush1.msra.mxu0 %v110
    %827 = vmatprep.subr.mxu0 0.0
    %828 = vmatpush1.msra.mxu0 %v109
    %829 = vmatprep.subr.mxu0 0.0
    %830 = vmatpush1.msra.mxu0 %v108
    %831 = vmatprep.subr.mxu0 0.0
    %832 = vmatpush1.msra.mxu0 %v107
    %833 = vmatprep.subr.mxu0 0.0
    %834 = vmatpush1.msra.mxu0 %v106
    %835 = vmatprep.subr.mxu0 0.0
    %836 = vmatpush1.msra.mxu0 %v105
    %837 = vmatprep.subr.mxu0 0.0
    %838 = vmatpush1.msra.mxu0 %v104
    %839 = vmatprep.subr.mxu0 0.0
    %840 = vmatpush1.msra.mxu0 %v103
    %841 = vmatprep.subr.mxu0 0.0
    %842 = vmatpush1.msra.mxu0 %v102
    %843 = vmatprep.subr.mxu0 0.0
    %844 = vmatpush1.msra.mxu0 %v101
    %845 = vmatprep.subr.mxu0 0.0
    %846 = vmatpush2.msra.mxu0 %v132
    %847 = vmatprep.subr.mxu0 0.0
    %848 = vmatpush2.msra.mxu0 %v131
    %849 = vmatprep.subr.mxu0 0.0
    %850 = vmatpush2.msra.mxu0 %v130
    %851 = vmatprep.subr.mxu0 0.0
    %852 = vmatpush2.msra.mxu0 %v129
    %853 = vmatprep.subr.mxu0 0.0
    %854 = vmatpush2.msra.mxu0 %v128
    %855 = vmatprep.subr.mxu0 0.0
    %856 = vmatpush2.msra.mxu0 %v127
    %857 = vmatprep.subr.mxu0 0.0
    %858 = vmatpush2.msra.mxu0 %v126
    %859 = vmatprep.subr.mxu0 0.0
    %860 = vmatpush2.msra.mxu0 %v125
    %861 = vmatprep.subr.mxu0 0.0
    %862 = vmatpush2.msra.mxu0 %v124
    %863 = vmatprep.subr.mxu0 0.0
    %864 = vmatpush2.msra.mxu0 %v123
    %865 = vmatprep.subr.mxu0 0.0
    %866 = vmatpush2.msra.mxu0 %v122
    %867 = vmatprep.subr.mxu0 0.0
    %868 = vmatpush2.msra.mxu0 %v121
    %869 = vmatprep.subr.mxu0 0.0
    %870 = vmatpush2.msra.mxu0 %v120
    %871 = vmatprep.subr.mxu0 0.0
    %872 = vmatpush2.msra.mxu0 %v119
    %873 = vmatprep.subr.mxu0 0.0
    %874 = vmatpush2.msra.mxu0 %v118
    %875 = vmatprep.subr.mxu0 0.0
    %876 = vmatpush2.msra.mxu0 %v117
    %877 = vmatprep.mubr.f32.mxu0 %v812
    %878 = vmatmul.mubr.f32.gmra.mxu0 %v810
    %v879 = vpop.f32.mrf.mxu0
    %v880 = vadd.f32 %v215, %v879
    %v881 = vpop.f32.mrf.mxu0
    %882 = vdwg.mxu0
    %v883 = vtanh.pop %v880
    %884 = vst [vmem:[%s209] sm:$0xff] %v883
    %s885 = scalar_lea.vmem [#allocation3], 40
    %v886 = vld [vmem:[%s885] sm:$0xff]
    %v887 = vld [vmem:[#allocation2] sm:$0xff]
    %888 = vmatprep.subr.mxu0 0.0
    %889 = vmatpush1.msra.mxu0 %v100
    %890 = vmatprep.subr.mxu0 0.0
    %891 = vmatpush1.msra.mxu0 %v99
    %892 = vmatprep.subr.mxu0 0.0
    %893 = vmatpush1.msra.mxu0 %v98
    %894 = vmatprep.subr.mxu0 0.0
    %895 = vmatpush1.msra.mxu0 %v97
    %896 = vmatprep.subr.mxu0 0.0
    %897 = vmatpush1.msra.mxu0 %v96
    %898 = vmatprep.subr.mxu0 0.0
    %899 = vmatpush1.msra.mxu0 %v95
    %900 = vmatprep.subr.mxu0 0.0
    %901 = vmatpush1.msra.mxu0 %v94
    %902 = vmatprep.subr.mxu0 0.0
    %903 = vmatpush1.msra.mxu0 %v93
    %904 = vmatprep.subr.mxu0 0.0
    %905 = vmatpush1.msra.mxu0 %v92
    %906 = vmatprep.subr.mxu0 0.0
    %907 = vmatpush1.msra.mxu0 %v91
    %908 = vmatprep.subr.mxu0 0.0
    %909 = vmatpush1.msra.mxu0 %v90
    %910 = vmatprep.subr.mxu0 0.0
    %911 = vmatpush1.msra.mxu0 %v89
    %912 = vmatprep.subr.mxu0 0.0
    %913 = vmatpush1.msra.mxu0 %v88
    %914 = vmatprep.subr.mxu0 0.0
    %915 = vmatpush1.msra.mxu0 %v87
    %916 = vmatprep.subr.mxu0 0.0
    %917 = vmatpush1.msra.mxu0 %v86
    %918 = vmatprep.subr.mxu0 0.0
    %919 = vmatpush1.msra.mxu0 %v85
    %920 = vmatprep.subr.mxu0 0.0
    %921 = vmatpush2.msra.mxu0 0.0
    %922 = vmatprep.subr.mxu0 0.0
    %923 = vmatpush2.msra.mxu0 0.0
    %924 = vmatprep.subr.mxu0 0.0
    %925 = vmatpush2.msra.mxu0 0.0
    %926 = vmatprep.subr.mxu0 0.0
    %927 = vmatpush2.msra.mxu0 0.0
    %928 = vmatprep.subr.mxu0 0.0
    %929 = vmatpush2.msra.mxu0 0.0
    %930 = vmatprep.subr.mxu0 0.0
    %931 = vmatpush2.msra.mxu0 0.0
    %932 = vmatprep.subr.mxu0 0.0
    %933 = vmatpush2.msra.mxu0 0.0
    %934 = vmatprep.subr.mxu0 0.0
    %935 = vmatpush2.msra.mxu0 0.0
    %936 = vmatprep.subr.mxu0 0.0
    %937 = vmatpush2.msra.mxu0 0.0
    %938 = vmatprep.subr.mxu0 0.0
    %939 = vmatpush2.msra.mxu0 0.0
    %940 = vmatprep.subr.mxu0 0.0
    %941 = vmatpush2.msra.mxu0 0.0
    %942 = vmatprep.subr.mxu0 0.0
    %943 = vmatpush2.msra.mxu0 0.0
    %944 = vmatprep.subr.mxu0 0.0
    %945 = vmatpush2.msra.mxu0 0.0
    %946 = vmatprep.subr.mxu0 0.0
    %947 = vmatpush2.msra.mxu0 0.0
    %948 = vmatprep.subr.mxu0 0.0
    %949 = vmatpush2.msra.mxu0 0.0
    %950 = vmatprep.subr.mxu0 0.0
    %951 = vmatpush2.msra.mxu0 0.0
    %952 = vmatprep.mubr.f32.mxu0 0.0
    %953 = vmatmul.mubr.f32.gmra.mxu0 %v887
    %v954 = vpop.f32.mrf.mxu0
    %v955 = vadd.f32 0.0, %v954
    %v956 = vpop.f32.mrf.mxu0
    %957 = vdwg.mxu0
    %v958 = vadd.f32 %v886, %v955
    %v959 = vtanh.pop %v958
    %960 = vst [vmem:[#allocation2] sm:$0xff] %v959
    %v961 = vld [vmem:[%s209] sm:$0xff]
    %962 = vmatprep.subr.mxu0 0.0
    %963 = vmatpush1.msra.mxu0 %v116
    %964 = vmatprep.subr.mxu0 0.0
    %965 = vmatpush1.msra.mxu0 %v115
    %966 = vmatprep.subr.mxu0 0.0
    %967 = vmatpush1.msra.mxu0 %v114
    %968 = vmatprep.subr.mxu0 0.0
    %969 = vmatpush1.msra.mxu0 %v113
    %970 = vmatprep.subr.mxu0 0.0
    %971 = vmatpush1.msra.mxu0 %v112
    %972 = vmatprep.subr.mxu0 0.0
    %973 = vmatpush1.msra.mxu0 %v111
    %974 = vmatprep.subr.mxu0 0.0
    %975 = vmatpush1.msra.mxu0 %v110
    %976 = vmatprep.subr.mxu0 0.0
    %977 = vmatpush1.msra.mxu0 %v109
    %978 = vmatprep.subr.mxu0 0.0
    %979 = vmatpush1.msra.mxu0 %v108
    %980 = vmatprep.subr.mxu0 0.0
    %981 = vmatpush1.msra.mxu0 %v107
    %982 = vmatprep.subr.mxu0 0.0
    %983 = vmatpush1.msra.mxu0 %v106
    %984 = vmatprep.subr.mxu0 0.0
    %985 = vmatpush1.msra.mxu0 %v105
    %986 = vmatprep.subr.mxu0 0.0
    %987 = vmatpush1.msra.mxu0 %v104
    %988 = vmatprep.subr.mxu0 0.0
    %989 = vmatpush1.msra.mxu0 %v103
    %990 = vmatprep.subr.mxu0 0.0
    %991 = vmatpush1.msra.mxu0 %v102
    %992 = vmatprep.subr.mxu0 0.0
    %993 = vmatpush1.msra.mxu0 %v101
    %994 = vmatprep.subr.mxu0 0.0
    %995 = vmatpush2.msra.mxu0 %v132
    %996 = vmatprep.subr.mxu0 0.0
    %997 = vmatpush2.msra.mxu0 %v131
    %998 = vmatprep.subr.mxu0 0.0
    %999 = vmatpush2.msra.mxu0 %v130
    %1000 = vmatprep.subr.mxu0 0.0
    %1001 = vmatpush2.msra.mxu0 %v129
    %1002 = vmatprep.subr.mxu0 0.0
    %1003 = vmatpush2.msra.mxu0 %v128
    %1004 = vmatprep.subr.mxu0 0.0
    %1005 = vmatpush2.msra.mxu0 %v127
    %1006 = vmatprep.subr.mxu0 0.0
    %1007 = vmatpush2.msra.mxu0 %v126
    %1008 = vmatprep.subr.mxu0 0.0
    %1009 = vmatpush2.msra.mxu0 %v125
    %1010 = vmatprep.subr.mxu0 0.0
    %1011 = vmatpush2.msra.mxu0 %v124
    %1012 = vmatprep.subr.mxu0 0.0
    %1013 = vmatpush2.msra.mxu0 %v123
    %1014 = vmatprep.subr.mxu0 0.0
    %1015 = vmatpush2.msra.mxu0 %v122
    %1016 = vmatprep.subr.mxu0 0.0
    %1017 = vmatpush2.msra.mxu0 %v121
    %1018 = vmatprep.subr.mxu0 0.0
    %1019 = vmatpush2.msra.mxu0 %v120
    %1020 = vmatprep.subr.mxu0 0.0
    %1021 = vmatpush2.msra.mxu0 %v119
    %1022 = vmatprep.subr.mxu0 0.0
    %1023 = vmatpush2.msra.mxu0 %v118
    %1024 = vmatprep.subr.mxu0 0.0
    %1025 = vmatpush2.msra.mxu0 %v117
    %1026 = vmatprep.mubr.f32.mxu0 %v961
    %1027 = vmatmul.mubr.f32.gmra.mxu0 %v959
    %v1028 = vpop.f32.mrf.mxu0
    %v1029 = vadd.f32 %v215, %v1028
    %v1030 = vpop.f32.mrf.mxu0
    %1031 = vdwg.mxu0
    %v1032 = vtanh.pop %v1029
    %1033 = vst [vmem:[%s209] sm:$0xff] %v1032
    %s1034 = scalar_lea.vmem [#allocation3], 48
    %v1035 = vld [vmem:[%s1034] sm:$0xff]
    %v1036 = vld [vmem:[#allocation2] sm:$0xff]
    %1037 = vmatprep.subr.mxu0 0.0
    %1038 = vmatpush1.msra.mxu0 %v100
    %1039 = vmatprep.subr.mxu0 0.0
    %1040 = vmatpush1.msra.mxu0 %v99
    %1041 = vmatprep.subr.mxu0 0.0
    %1042 = vmatpush1.msra.mxu0 %v98
    %1043 = vmatprep.subr.mxu0 0.0
    %1044 = vmatpush1.msra.mxu0 %v97
    %1045 = vmatprep.subr.mxu0 0.0
    %1046 = vmatpush1.msra.mxu0 %v96
    %1047 = vmatprep.subr.mxu0 0.0
    %1048 = vmatpush1.msra.mxu0 %v95
    %1049 = vmatprep.subr.mxu0 0.0
    %1050 = vmatpush1.msra.mxu0 %v94
    %1051 = vmatprep.subr.mxu0 0.0
    %1052 = vmatpush1.msra.mxu0 %v93
    %1053 = vmatprep.subr.mxu0 0.0
    %1054 = vmatpush1.msra.mxu0 %v92
    %1055 = vmatprep.subr.mxu0 0.0
    %1056 = vmatpush1.msra.mxu0 %v91
    %1057 = vmatprep.subr.mxu0 0.0
    %1058 = vmatpush1.msra.mxu0 %v90
    %1059 = vmatprep.subr.mxu0 0.0
    %1060 = vmatpush1.msra.mxu0 %v89
    %1061 = vmatprep.subr.mxu0 0.0
    %1062 = vmatpush1.msra.mxu0 %v88
    %1063 = vmatprep.subr.mxu0 0.0
    %1064 = vmatpush1.msra.mxu0 %v87
    %1065 = vmatprep.subr.mxu0 0.0
    %1066 = vmatpush1.msra.mxu0 %v86
    %1067 = vmatprep.subr.mxu0 0.0
    %1068 = vmatpush1.msra.mxu0 %v85
    %1069 = vmatprep.subr.mxu0 0.0
    %1070 = vmatpush2.msra.mxu0 0.0
    %1071 = vmatprep.subr.mxu0 0.0
    %1072 = vmatpush2.msra.mxu0 0.0
    %1073 = vmatprep.subr.mxu0 0.0
    %1074 = vmatpush2.msra.mxu0 0.0
    %1075 = vmatprep.subr.mxu0 0.0
    %1076 = vmatpush2.msra.mxu0 0.0
    %1077 = vmatprep.subr.mxu0 0.0
    %1078 = vmatpush2.msra.mxu0 0.0
    %1079 = vmatprep.subr.mxu0 0.0
    %1080 = vmatpush2.msra.mxu0 0.0
    %1081 = vmatprep.subr.mxu0 0.0
    %1082 = vmatpush2.msra.mxu0 0.0
    %1083 = vmatprep.subr.mxu0 0.0
    %1084 = vmatpush2.msra.mxu0 0.0
    %1085 = vmatprep.subr.mxu0 0.0
    %1086 = vmatpush2.msra.mxu0 0.0
    %1087 = vmatprep.subr.mxu0 0.0
    %1088 = vmatpush2.msra.mxu0 0.0
    %1089 = vmatprep.subr.mxu0 0.0
    %1090 = vmatpush2.msra.mxu0 0.0
    %1091 = vmatprep.subr.mxu0 0.0
    %1092 = vmatpush2.msra.mxu0 0.0
    %1093 = vmatprep.subr.mxu0 0.0
    %1094 = vmatpush2.msra.mxu0 0.0
    %1095 = vmatprep.subr.mxu0 0.0
    %1096 = vmatpush2.msra.mxu0 0.0
    %1097 = vmatprep.subr.mxu0 0.0
    %1098 = vmatpush2.msra.mxu0 0.0
    %1099 = vmatprep.subr.mxu0 0.0
    %1100 = vmatpush2.msra.mxu0 0.0
    %1101 = vmatprep.mubr.f32.mxu0 0.0
    %1102 = vmatmul.mubr.f32.gmra.mxu0 %v1036
    %v1103 = vpop.f32.mrf.mxu0
    %v1104 = vadd.f32 0.0, %v1103
    %v1105 = vpop.f32.mrf.mxu0
    %1106 = vdwg.mxu0
    %v1107 = vadd.f32 %v1035, %v1104
    %v1108 = vtanh.pop %v1107
    %1109 = vst [vmem:[#allocation2] sm:$0xff] %v1108
    %v1110 = vld [vmem:[%s209] sm:$0xff]
    %1111 = vmatprep.subr.mxu0 0.0
    %1112 = vmatpush1.msra.mxu0 %v116
    %1113 = vmatprep.subr.mxu0 0.0
    %1114 = vmatpush1.msra.mxu0 %v115
    %1115 = vmatprep.subr.mxu0 0.0
    %1116 = vmatpush1.msra.mxu0 %v114
    %1117 = vmatprep.subr.mxu0 0.0
    %1118 = vmatpush1.msra.mxu0 %v113
    %1119 = vmatprep.subr.mxu0 0.0
    %1120 = vmatpush1.msra.mxu0 %v112
    %1121 = vmatprep.subr.mxu0 0.0
    %1122 = vmatpush1.msra.mxu0 %v111
    %1123 = vmatprep.subr.mxu0 0.0
    %1124 = vmatpush1.msra.mxu0 %v110
    %1125 = vmatprep.subr.mxu0 0.0
    %1126 = vmatpush1.msra.mxu0 %v109
    %1127 = vmatprep.subr.mxu0 0.0
    %1128 = vmatpush1.msra.mxu0 %v108
    %1129 = vmatprep.subr.mxu0 0.0
    %1130 = vmatpush1.msra.mxu0 %v107
    %1131 = vmatprep.subr.mxu0 0.0
    %1132 = vmatpush1.msra.mxu0 %v106
    %1133 = vmatprep.subr.mxu0 0.0
    %1134 = vmatpush1.msra.mxu0 %v105
    %1135 = vmatprep.subr.mxu0 0.0
    %1136 = vmatpush1.msra.mxu0 %v104
    %1137 = vmatprep.subr.mxu0 0.0
    %1138 = vmatpush1.msra.mxu0 %v103
    %1139 = vmatprep.subr.mxu0 0.0
    %1140 = vmatpush1.msra.mxu0 %v102
    %1141 = vmatprep.subr.mxu0 0.0
    %1142 = vmatpush1.msra.mxu0 %v101
    %1143 = vmatprep.subr.mxu0 0.0
    %1144 = vmatpush2.msra.mxu0 %v132
    %1145 = vmatprep.subr.mxu0 0.0
    %1146 = vmatpush2.msra.mxu0 %v131
    %1147 = vmatprep.subr.mxu0 0.0
    %1148 = vmatpush2.msra.mxu0 %v130
    %1149 = vmatprep.subr.mxu0 0.0
    %1150 = vmatpush2.msra.mxu0 %v129
    %1151 = vmatprep.subr.mxu0 0.0
    %1152 = vmatpush2.msra.mxu0 %v128
    %1153 = vmatprep.subr.mxu0 0.0
    %1154 = vmatpush2.msra.mxu0 %v127
    %1155 = vmatprep.subr.mxu0 0.0
    %1156 = vmatpush2.msra.mxu0 %v126
    %1157 = vmatprep.subr.mxu0 0.0
    %1158 = vmatpush2.msra.mxu0 %v125
    %1159 = vmatprep.subr.mxu0 0.0
    %1160 = vmatpush2.msra.mxu0 %v124
    %1161 = vmatprep.subr.mxu0 0.0
    %1162 = vmatpush2.msra.mxu0 %v123
    %1163 = vmatprep.subr.mxu0 0.0
    %1164 = vmatpush2.msra.mxu0 %v122
    %1165 = vmatprep.subr.mxu0 0.0
    %1166 = vmatpush2.msra.mxu0 %v121
    %1167 = vmatprep.subr.mxu0 0.0
    %1168 = vmatpush2.msra.mxu0 %v120
    %1169 = vmatprep.subr.mxu0 0.0
    %1170 = vmatpush2.msra.mxu0 %v119
    %1171 = vmatprep.subr.mxu0 0.0
    %1172 = vmatpush2.msra.mxu0 %v118
    %1173 = vmatprep.subr.mxu0 0.0
    %1174 = vmatpush2.msra.mxu0 %v117
    %1175 = vmatprep.mubr.f32.mxu0 %v1110
    %1176 = vmatmul.mubr.f32.gmra.mxu0 %v1108
    %v1177 = vpop.f32.mrf.mxu0
    %v1178 = vadd.f32 %v215, %v1177
    %v1179 = vpop.f32.mrf.mxu0
    %1180 = vdwg.mxu0
    %v1181 = vtanh.pop %v1178
    %1182 = vst [vmem:[%s209] sm:$0xff] %v1181
    %s1183 = scalar_lea.vmem [#allocation3], 56
    %v1184 = vld [vmem:[%s1183] sm:$0xff]
    %v1185 = vld [vmem:[#allocation2] sm:$0xff]
    %1186 = vmatprep.subr.mxu0 0.0
    %1187 = vmatpush1.msra.mxu0 %v100
    %1188 = vmatprep.subr.mxu0 0.0
    %1189 = vmatpush1.msra.mxu0 %v99
    %1190 = vmatprep.subr.mxu0 0.0
    %1191 = vmatpush1.msra.mxu0 %v98
    %1192 = vmatprep.subr.mxu0 0.0
    %1193 = vmatpush1.msra.mxu0 %v97
    %1194 = vmatprep.subr.mxu0 0.0
    %1195 = vmatpush1.msra.mxu0 %v96
    %1196 = vmatprep.subr.mxu0 0.0
    %1197 = vmatpush1.msra.mxu0 %v95
    %1198 = vmatprep.subr.mxu0 0.0
    %1199 = vmatpush1.msra.mxu0 %v94
    %1200 = vmatprep.subr.mxu0 0.0
    %1201 = vmatpush1.msra.mxu0 %v93
    %1202 = vmatprep.subr.mxu0 0.0
    %1203 = vmatpush1.msra.mxu0 %v92
    %1204 = vmatprep.subr.mxu0 0.0
    %1205 = vmatpush1.msra.mxu0 %v91
    %1206 = vmatprep.subr.mxu0 0.0
    %1207 = vmatpush1.msra.mxu0 %v90
    %1208 = vmatprep.subr.mxu0 0.0
    %1209 = vmatpush1.msra.mxu0 %v89
    %1210 = vmatprep.subr.mxu0 0.0
    %1211 = vmatpush1.msra.mxu0 %v88
    %1212 = vmatprep.subr.mxu0 0.0
    %1213 = vmatpush1.msra.mxu0 %v87
    %1214 = vmatprep.subr.mxu0 0.0
    %1215 = vmatpush1.msra.mxu0 %v86
    %1216 = vmatprep.subr.mxu0 0.0
    %1217 = vmatpush1.msra.mxu0 %v85
    %1218 = vmatprep.subr.mxu0 0.0
    %1219 = vmatpush2.msra.mxu0 0.0
    %1220 = vmatprep.subr.mxu0 0.0
    %1221 = vmatpush2.msra.mxu0 0.0
    %1222 = vmatprep.subr.mxu0 0.0
    %1223 = vmatpush2.msra.mxu0 0.0
    %1224 = vmatprep.subr.mxu0 0.0
    %1225 = vmatpush2.msra.mxu0 0.0
    %1226 = vmatprep.subr.mxu0 0.0
    %1227 = vmatpush2.msra.mxu0 0.0
    %1228 = vmatprep.subr.mxu0 0.0
    %1229 = vmatpush2.msra.mxu0 0.0
    %1230 = vmatprep.subr.mxu0 0.0
    %1231 = vmatpush2.msra.mxu0 0.0
    %1232 = vmatprep.subr.mxu0 0.0
    %1233 = vmatpush2.msra.mxu0 0.0
    %1234 = vmatprep.subr.mxu0 0.0
    %1235 = vmatpush2.msra.mxu0 0.0
    %1236 = vmatprep.subr.mxu0 0.0
    %1237 = vmatpush2.msra.mxu0 0.0
    %1238 = vmatprep.subr.mxu0 0.0
    %1239 = vmatpush2.msra.mxu0 0.0
    %1240 = vmatprep.subr.mxu0 0.0
    %1241 = vmatpush2.msra.mxu0 0.0
    %1242 = vmatprep.subr.mxu0 0.0
    %1243 = vmatpush2.msra.mxu0 0.0
    %1244 = vmatprep.subr.mxu0 0.0
    %1245 = vmatpush2.msra.mxu0 0.0
    %1246 = vmatprep.subr.mxu0 0.0
    %1247 = vmatpush2.msra.mxu0 0.0
    %1248 = vmatprep.subr.mxu0 0.0
    %1249 = vmatpush2.msra.mxu0 0.0
    %1250 = vmatprep.mubr.f32.mxu0 0.0
    %1251 = vmatmul.mubr.f32.gmra.mxu0 %v1185
    %v1252 = vpop.f32.mrf.mxu0
    %v1253 = vadd.f32 0.0, %v1252
    %v1254 = vpop.f32.mrf.mxu0
    %1255 = vdwg.mxu0
    %v1256 = vadd.f32 %v1184, %v1253
    %v1257 = vtanh.pop %v1256
    %1258 = vst [vmem:[#allocation2] sm:$0xff] %v1257
    %v1259 = vld [vmem:[%s209] sm:$0xff]
    %1260 = vmatprep.subr.mxu0 0.0
    %1261 = vmatpush1.msra.mxu0 %v116
    %1262 = vmatprep.subr.mxu0 0.0
    %1263 = vmatpush1.msra.mxu0 %v115
    %1264 = vmatprep.subr.mxu0 0.0
    %1265 = vmatpush1.msra.mxu0 %v114
    %1266 = vmatprep.subr.mxu0 0.0
    %1267 = vmatpush1.msra.mxu0 %v113
    %1268 = vmatprep.subr.mxu0 0.0
    %1269 = vmatpush1.msra.mxu0 %v112
    %1270 = vmatprep.subr.mxu0 0.0
    %1271 = vmatpush1.msra.mxu0 %v111
    %1272 = vmatprep.subr.mxu0 0.0
    %1273 = vmatpush1.msra.mxu0 %v110
    %1274 = vmatprep.subr.mxu0 0.0
    %1275 = vmatpush1.msra.mxu0 %v109
    %1276 = vmatprep.subr.mxu0 0.0
    %1277 = vmatpush1.msra.mxu0 %v108
    %1278 = vmatprep.subr.mxu0 0.0
    %1279 = vmatpush1.msra.mxu0 %v107
    %1280 = vmatprep.subr.mxu0 0.0
    %1281 = vmatpush1.msra.mxu0 %v106
    %1282 = vmatprep.subr.mxu0 0.0
    %1283 = vmatpush1.msra.mxu0 %v105
    %1284 = vmatprep.subr.mxu0 0.0
    %1285 = vmatpush1.msra.mxu0 %v104
    %1286 = vmatprep.subr.mxu0 0.0
    %1287 = vmatpush1.msra.mxu0 %v103
    %1288 = vmatprep.subr.mxu0 0.0
    %1289 = vmatpush1.msra.mxu0 %v102
    %1290 = vmatprep.subr.mxu0 0.0
    %1291 = vmatpush1.msra.mxu0 %v101
    %1292 = vmatprep.subr.mxu0 0.0
    %1293 = vmatpush2.msra.mxu0 %v132
    %1294 = vmatprep.subr.mxu0 0.0
    %1295 = vmatpush2.msra.mxu0 %v131
    %1296 = vmatprep.subr.mxu0 0.0
    %1297 = vmatpush2.msra.mxu0 %v130
    %1298 = vmatprep.subr.mxu0 0.0
    %1299 = vmatpush2.msra.mxu0 %v129
    %1300 = vmatprep.subr.mxu0 0.0
    %1301 = vmatpush2.msra.mxu0 %v128
    %1302 = vmatprep.subr.mxu0 0.0
    %1303 = vmatpush2.msra.mxu0 %v127
    %1304 = vmatprep.subr.mxu0 0.0
    %1305 = vmatpush2.msra.mxu0 %v126
    %1306 = vmatprep.subr.mxu0 0.0
    %1307 = vmatpush2.msra.mxu0 %v125
    %1308 = vmatprep.subr.mxu0 0.0
    %1309 = vmatpush2.msra.mxu0 %v124
    %1310 = vmatprep.subr.mxu0 0.0
    %1311 = vmatpush2.msra.mxu0 %v123
    %1312 = vmatprep.subr.mxu0 0.0
    %1313 = vmatpush2.msra.mxu0 %v122
    %1314 = vmatprep.subr.mxu0 0.0
    %1315 = vmatpush2.msra.mxu0 %v121
    %1316 = vmatprep.subr.mxu0 0.0
    %1317 = vmatpush2.msra.mxu0 %v120
    %1318 = vmatprep.subr.mxu0 0.0
    %1319 = vmatpush2.msra.mxu0 %v119
    %1320 = vmatprep.subr.mxu0 0.0
    %1321 = vmatpush2.msra.mxu0 %v118
    %1322 = vmatprep.subr.mxu0 0.0
    %1323 = vmatpush2.msra.mxu0 %v117
    %1324 = vmatprep.mubr.f32.mxu0 %v1259
    %1325 = vmatmul.mubr.f32.gmra.mxu0 %v1257
    %v1326 = vpop.f32.mrf.mxu0
    %v1327 = vadd.f32 %v215, %v1326
    %v1328 = vpop.f32.mrf.mxu0
    %1329 = vdwg.mxu0
    %v1330 = vtanh.pop %v1327
    %1331 = vst [vmem:[%s209] sm:$0xff] %v1330
    // Predicated region
    $region46: #{tpu_custom_call.1} parent=1 // pred_check
      %p1332 = pneg %p79
    $region47: #{tpu_custom_call.1} parent=1 // pred_check_branch
      %1334 = sbr.rel (%p1332) target = $region49
    $region48: #{tpu_custom_call.1} parent=1 // pred_region
      %v1335 = vld [vmem:[#allocation9] sm:$0xff]
      %v1336 = vld [vmem:[#allocation9 + $0x8] sm:$0xff]
      %v1337 = vld [vmem:[#allocation9 + $0x10] sm:$0xff]
      %v1338 = vld [vmem:[#allocation9 + $0x18] sm:$0xff]
      %v1339 = vld [vmem:[#allocation9 + $0x20] sm:$0xff]
      %v1340 = vld [vmem:[#allocation9 + $0x28] sm:$0xff]
      %v1341 = vld [vmem:[#allocation9 + $0x30] sm:$0xff]
      %v1342 = vld [vmem:[#allocation9 + $0x38] sm:$0xff]
      %v1343 = vld [vmem:[#allocation9 + $0x40] sm:$0xff]
      %v1344 = vld [vmem:[#allocation9 + $0x48] sm:$0xff]
      %v1345 = vld [vmem:[#allocation9 + $0x50] sm:$0xff]
      %v1346 = vld [vmem:[#allocation9 + $0x58] sm:$0xff]
      %v1347 = vld [vmem:[#allocation9 + $0x60] sm:$0xff]
      %v1348 = vld [vmem:[#allocation9 + $0x68] sm:$0xff]
      %v1349 = vld [vmem:[#allocation9 + $0x70] sm:$0xff]
      %v1350 = vld [vmem:[#allocation9 + $0x78] sm:$0xff]
      %v1351 = vld [vmem:[%s5] sm:$0x1]
      %v1353 = vlaneseq
      %v1354 = vshrl.u32 %v1353, 7
      %v1355 = vsub.s32 0, %v1354
      %v1356 = vrot.slane %v1351, %v1355
      %1358 = vmatprep.subr.mxu0 0.0
      %1359 = vmatpush1.msra.mxu0 %v1350
      %1360 = vmatprep.subr.mxu0 0.0
      %1361 = vmatpush1.msra.mxu0 %v1349
      %1362 = vmatprep.subr.mxu0 0.0
      %1363 = vmatpush1.msra.mxu0 %v1348
      %1364 = vmatprep.subr.mxu0 0.0
      %1365 = vmatpush1.msra.mxu0 %v1347
      %1366 = vmatprep.subr.mxu0 0.0
      %1367 = vmatpush1.msra.mxu0 %v1346
      %1368 = vmatprep.subr.mxu0 0.0
      %1369 = vmatpush1.msra.mxu0 %v1345
      %1370 = vmatprep.subr.mxu0 0.0
      %1371 = vmatpush1.msra.mxu0 %v1344
      %1372 = vmatprep.subr.mxu0 0.0
      %1373 = vmatpush1.msra.mxu0 %v1343
      %1374 = vmatprep.subr.mxu0 0.0
      %1375 = vmatpush1.msra.mxu0 %v1342
      %1376 = vmatprep.subr.mxu0 0.0
      %1377 = vmatpush1.msra.mxu0 %v1341
      %1378 = vmatprep.subr.mxu0 0.0
      %1379 = vmatpush1.msra.mxu0 %v1340
      %1380 = vmatprep.subr.mxu0 0.0
      %1381 = vmatpush1.msra.mxu0 %v1339
      %1382 = vmatprep.subr.mxu0 0.0
      %1383 = vmatpush1.msra.mxu0 %v1338
      %1384 = vmatprep.subr.mxu0 0.0
      %1385 = vmatpush1.msra.mxu0 %v1337
      %1386 = vmatprep.subr.mxu0 0.0
      %1387 = vmatpush1.msra.mxu0 %v1336
      %1388 = vmatprep.subr.mxu0 0.0
      %1389 = vmatpush1.msra.mxu0 %v1335
      %1390 = vmatprep.subr.mxu0 0.0
      %1391 = vmatpush2.msra.mxu0 0.0
      %1392 = vmatprep.subr.mxu0 0.0
      %1393 = vmatpush2.msra.mxu0 0.0
      %1394 = vmatprep.subr.mxu0 0.0
      %1395 = vmatpush2.msra.mxu0 0.0
      %1396 = vmatprep.subr.mxu0 0.0
      %1397 = vmatpush2.msra.mxu0 0.0
      %1398 = vmatprep.subr.mxu0 0.0
      %1399 = vmatpush2.msra.mxu0 0.0
      %1400 = vmatprep.subr.mxu0 0.0
      %1401 = vmatpush2.msra.mxu0 0.0
      %1402 = vmatprep.subr.mxu0 0.0
      %1403 = vmatpush2.msra.mxu0 0.0
      %1404 = vmatprep.subr.mxu0 0.0
      %1405 = vmatpush2.msra.mxu0 0.0
      %1406 = vmatprep.subr.mxu0 0.0
      %1407 = vmatpush2.msra.mxu0 0.0
      %1408 = vmatprep.subr.mxu0 0.0
      %1409 = vmatpush2.msra.mxu0 0.0
      %1410 = vmatprep.subr.mxu0 0.0
      %1411 = vmatpush2.msra.mxu0 0.0
      %1412 = vmatprep.subr.mxu0 0.0
      %1413 = vmatpush2.msra.mxu0 0.0
      %1414 = vmatprep.subr.mxu0 0.0
      %1415 = vmatpush2.msra.mxu0 0.0
      %1416 = vmatprep.subr.mxu0 0.0
      %1417 = vmatpush2.msra.mxu0 0.0
      %1418 = vmatprep.subr.mxu0 0.0
      %1419 = vmatpush2.msra.mxu0 0.0
      %1420 = vmatprep.subr.mxu0 0.0
      %1421 = vmatpush2.msra.mxu0 0.0
      %1422 = vmatprep.mubr.f32.mxu0 0.0
      %1423 = vmatmul.mubr.f32.gmra.mxu0 %v1330
      %v1424 = vpop.f32.mrf.mxu0
      %v1425 = vadd.f32 %v1356, %v1424
      %v1426 = vpop.f32.mrf.mxu0
      %1427 = vdwg.mxu0
      %1428 = vst [vmem:[#allocation11] sm:$0xff] %v1425
    $region49: #{tpu_custom_call.1} parent=1 // pred_fallthru
      _
    // Predicated region
    $region50: #{tpu_custom_call.1} parent=1 // pred_check
      _
    $region51: #{tpu_custom_call.1} parent=1 // pred_check_branch
      %1430 = sbr.rel (0) target = $region53
    $region52: #{tpu_custom_call.1} parent=1 // pred_region
      %s1432 = ssub.s32 128, 128
      %1433 = vsyncadd [#allocation5], %s1432
      %s1435 = sshll.u32 [#allocation11], 4
      %s1436 = int_to_ptr.vmem [resolvable:$true] %s1435
      %1438 = dma.vmem_to_hbm [thread:$0]  %s1436, 128, %s6, [#allocation5]
    $region53: #{tpu_custom_call.1} parent=1 // pred_fallthru
      _
    // Predicated region
    $region54: #{tpu_custom_call.1} parent=1 // pred_check
      _
    $region55: #{tpu_custom_call.1} parent=1 // pred_check_branch
      %1440 = sbr.rel (0) target = $region57
    $region56: #{tpu_custom_call.1} parent=1 // pred_region
      %1441 = dma.done [#allocation5], 128
    $region57: #{tpu_custom_call.1} parent=1 // pred_fallthru
      _
    %1442 = vsyncpa [#allocation4], 1
    %1443 = vsyncpa [#allocation7], 1
    %1444 = vsyncpa [#allocation10], 1
    %1445 = vsyncpa [#allocation5], 1

</llo_original>
